<compile_context>
chip_gen: v5e
topology: v5e:2x2
jax: 0.10.0
libtpu: 0.0.40
codegen_flags: <defaults>
</compile_context>

<pallas_src>
import jax
import jax.numpy as jnp
from jax import lax
from jax.experimental import pallas as pl
from jax.experimental.pallas import tpu as pltpu


def double_rnn_kernel(embeds_ref,                 # (S, Bb, E)
                      w_ih1_ref, w_hh1_ref, b1_ref,   # (E,H), (H,H), (1,H)
                      w2c_ref, b2_ref,                # (2H,H), (1,H)
                      w_out_ref, b_out_ref,           # (H,T), (1,T)
                      out_ref,                        # (S, Bb, T)
                      xw1_scratch, rnn_scratch):      # (S, Bb, H) each
    S, Bb, E = embeds_ref.shape
    H = w_hh1_ref.shape[0]
    T = w_out_ref.shape[1]

    # Hoisted layer-1 input projection (+ folded bias): one batched MXU matmul,
    # removed from the serial critical path of the recurrence.
    x2d = embeds_ref[...].reshape(S * Bb, E)
    xw1 = jnp.dot(x2d, w_ih1_ref[...], preferred_element_type=jnp.float32) + b1_ref[...]
    xw1_scratch[...] = xw1.reshape(S, Bb, H)

    def step(t, carry):
        h1, h2 = carry                                           # each (Bb, H)
        # layer 1: only the recurrent dot remains in the loop
        h1n = jnp.tanh(
            xw1_scratch[t]
            + jnp.dot(h1, w_hh1_ref[...], preferred_element_type=jnp.float32))
        # layer 2: fused [h1', h2] @ [W_ih2^T; W_hh2^T] + (b_ih2 + b_hh2)
        z2 = jnp.dot(jnp.concatenate([h1n, h2], axis=1), w2c_ref[...],
                     preferred_element_type=jnp.float32) + b2_ref[...]
        h2n = jnp.tanh(z2)
        rnn_scratch[t] = h2n                                     # rnn_out[t] = top-layer h
        return (h1n, h2n)

    h0 = jnp.zeros((Bb, H), jnp.float32)
    lax.fori_loop(0, S, step, (h0, h0), unroll=True)             # S static & small

    # hidden2tag + numerically-stable log_softmax over the tag dimension
    rnn2d = rnn_scratch[...].reshape(S * Bb, H)
    tag_space = (jnp.dot(rnn2d, w_out_ref[...],
                         preferred_element_type=jnp.float32)
                 + b_out_ref[...])                               # (S*Bb, T)
    m = jnp.max(tag_space, axis=1, keepdims=True)
    z = tag_space - m
    lse = jnp.log(jnp.sum(jnp.exp(z), axis=1, keepdims=True))
    out_ref[...] = (z - lse).reshape(S, Bb, T)


def double_rnn_forward_batch(sentences, params, *, b_block=8):
    """sentences: int32 (B, S) token ids. Returns (B, S, tagset_size) log-probs.

    Each sentence is processed independently with a zero initial hidden state,
    matching the PyTorch module's per-sentence forward.
    """
    B, S = sentences.shape
    assert B % b_block == 0, "batch must be a multiple of b_block"
    E = params['embedding'].shape[1]
    H = params['w_hh1'].shape[0]
    T = params['w_out'].shape[0]

    embeds = jnp.take(params['embedding'], sentences, axis=0)    # (B, S, E) gather glue
    embeds = jnp.transpose(embeds, (1, 0, 2)).astype(jnp.float32)  # time-major (S, B, E)

    args = (
        embeds,
        params['w_ih1'].T.astype(jnp.float32),                               # (E, H)
        params['w_hh1'].T.astype(jnp.float32),                               # (H, H)
        (params['b_ih1'] + params['b_hh1'])[None, :].astype(jnp.float32),    # (1, H)
        jnp.concatenate([params['w_ih2'].T, params['w_hh2'].T],
                        axis=0).astype(jnp.float32),                         # (2H, H)
        (params['b_ih2'] + params['b_hh2'])[None, :].astype(jnp.float32),    # (1, H)
        params['w_out'].T.astype(jnp.float32),                               # (H, T)
        params['b_out'][None, :].astype(jnp.float32),                        # (1, T)
    )

    out = pl.pallas_call(
        double_rnn_kernel,
        out_shape=jax.ShapeDtypeStruct((S, B, T), jnp.float32),
        grid=(B // b_block,),
        in_specs=[
            pl.BlockSpec((S, b_block, E), lambda b: (0, b, 0)),   # embeds block
            pl.BlockSpec((E, H), lambda b: (0, 0)),
            pl.BlockSpec((H, H), lambda b: (0, 0)),
            pl.BlockSpec((1, H), lambda b: (0, 0)),
            pl.BlockSpec((2 * H, H), lambda b: (0, 0)),
            pl.BlockSpec((1, H), lambda b: (0, 0)),
            pl.BlockSpec((H, T), lambda b: (0, 0)),
            pl.BlockSpec((1, T), lambda b: (0, 0)),
        ],
        out_specs=pl.BlockSpec((S, b_block, T), lambda b: (0, b, 0)),
        scratch_shapes=[pltpu.VMEM((S, b_block, H), jnp.float32),
                        pltpu.VMEM((S, b_block, H), jnp.float32)],
        compiler_params=pltpu.CompilerParams(
            dimension_semantics=("parallel",)),                  # 2 TCs on v7x
    )(*args)

    return jnp.transpose(out, (1, 0, 2))                         # (B, S, T)


def double_rnn_forward(sentence, params):
    """Single sentence (S,) -> (S, T) log-probs, mirroring the torch forward."""
    return double_rnn_forward_batch(sentence[None, :], params, b_block=1)[0]


def double_rnn_ref(sentence, params):
    """Pure-JAX reference mirroring torch semantics (zero initial hidden)."""
    embeds = jnp.take(params['embedding'], sentence, axis=0)
    H = params['w_hh1'].shape[0]

    def step(carry, x_t):
        h1, h2 = carry
        h1n = jnp.tanh(x_t @ params['w_ih1'].T + params['b_ih1']
                       + h1 @ params['w_hh1'].T + params['b_hh1'])
        h2n = jnp.tanh(h1n @ params['w_ih2'].T + params['b_ih2']
                       + h2 @ params['w_hh2'].T + params['b_hh2'])
        return (h1n, h2n), h2n

    h0 = jnp.zeros((H,), jnp.float32)
    _, rnn_out = lax.scan(step, (h0, h0), embeds)
    tag_space = rnn_out @ params['w_out'].T + params['b_out']
    return jax.nn.log_softmax(tag_space, axis=1)


if __name__ == "__main__":
    V, E, H, T, S, B = 32, 16, 32, 8, 8, 16   # vocab, embed, hidden, tagset, seq_len, batch
    key = jax.random.PRNGKey(0)
    ks = jax.random.split(key, 12)

    def u(k, shape, fan):
        bound = 1.0 / jnp.sqrt(jnp.float32(fan))
        return jax.random.uniform(k, shape, jnp.float32, -bound, bound)

    params = dict(
        embedding=jax.random.normal(ks[0], (V, E), jnp.float32),   # nn.Embedding ~ N(0,1)
        w_ih1=u(ks[1], (H, E), H), w_hh1=u(ks[2], (H, H), H),
        b_ih1=u(ks[3], (H,), H),   b_hh1=u(ks[4], (H,), H),
        w_ih2=u(ks[5], (H, H), H), w_hh2=u(ks[6], (H, H), H),
        b_ih2=u(ks[7], (H,), H),   b_hh2=u(ks[8], (H,), H),
        w_out=u(ks[9], (T, H), H), b_out=u(ks[10], (T,), H),
    )
    sentences = jax.random.randint(ks[11], (B, S), 0, V, dtype=jnp.int32)

    # Batched path (grid over batch blocks, parallel axis).
    out = jax.block_until_ready(
        double_rnn_forward_batch(sentences, params, b_block=8))
    ref = jax.block_until_ready(
        jax.vmap(lambda s: double_rnn_ref(s, params))(sentences))
    assert out.shape == (B, S, T)
    assert jnp.allclose(out, ref, atol=1e-5, rtol=1e-5)

    # Single-sentence path matching the original module's forward.
    out1 = jax.block_until_ready(double_rnn_forward(sentences[0], params))
    assert out1.shape == (S, T)
    assert jnp.allclose(out1, ref[0], atol=1e-5, rtol=1e-5)

    print("KERNEL_OK")
</pallas_src>

<mosaic_0001>
module attributes {stable_mosaic.version = 11 : i64} {
  func.func @double_rnn_kernel(%arg0: i32, %arg1: memref<8x8x16xf32, #tpu.memory_space<vmem>>, %arg2: memref<16x32xf32, #tpu.memory_space<vmem>>, %arg3: memref<32x32xf32, #tpu.memory_space<vmem>>, %arg4: memref<1x32xf32, #tpu.memory_space<vmem>>, %arg5: memref<64x32xf32, #tpu.memory_space<vmem>>, %arg6: memref<1x32xf32, #tpu.memory_space<vmem>>, %arg7: memref<32x8xf32, #tpu.memory_space<vmem>>, %arg8: memref<1x8xf32, #tpu.memory_space<vmem>>, %arg9: memref<8x8x8xf32, #tpu.memory_space<vmem>>, %arg10: memref<8x8x32xf32, #tpu.memory_space<vmem>>, %arg11: memref<8x8x32xf32, #tpu.memory_space<vmem>>) attributes {dimension_semantics = [#tpu.dimension_semantics<parallel>], iteration_bounds = array<i64: 2>, scalar_prefetch = 0 : i64, scratch_operands = 2 : i64, tpu.core_type = #tpu.core_type<tc>, window_params = [{transform_indices = @transform_0, window_bounds = array<i64: 8, 8, 16>}, {pipeline_mode = #tpu.pipeline_mode<synchronous>, transform_indices = @transform_1, window_bounds = array<i64: 16, 32>}, {pipeline_mode = #tpu.pipeline_mode<synchronous>, transform_indices = @transform_2, window_bounds = array<i64: 32, 32>}, {pipeline_mode = #tpu.pipeline_mode<synchronous>, transform_indices = @transform_3, window_bounds = array<i64: 1, 32>}, {pipeline_mode = #tpu.pipeline_mode<synchronous>, transform_indices = @transform_4, window_bounds = array<i64: 64, 32>}, {pipeline_mode = #tpu.pipeline_mode<synchronous>, transform_indices = @transform_5, window_bounds = array<i64: 1, 32>}, {pipeline_mode = #tpu.pipeline_mode<synchronous>, transform_indices = @transform_6, window_bounds = array<i64: 32, 8>}, {pipeline_mode = #tpu.pipeline_mode<synchronous>, transform_indices = @transform_7, window_bounds = array<i64: 1, 8>}, {transform_indices = @transform_8, window_bounds = array<i64: 8, 8, 8>}]} {
    %c0 = arith.constant 0 : index
    %c0_0 = arith.constant 0 : index
    %c0_1 = arith.constant 0 : index
    %0 = vector.load %arg1[%c0, %c0_0, %c0_1] : memref<8x8x16xf32, #tpu.memory_space<vmem>>, vector<8x8x16xf32>
    %1 = vector.shape_cast %0 : vector<8x8x16xf32> to vector<64x16xf32>
    %c0_2 = arith.constant 0 : index
    %c0_3 = arith.constant 0 : index
    %2 = vector.load %arg2[%c0_2, %c0_3] : memref<16x32xf32, #tpu.memory_space<vmem>>, vector<16x32xf32>
    %cst = arith.constant dense<0.000000e+00> : vector<64x32xf32>
    %3 = tpu.matmul %1, %2, %cst {dimension_numbers = #tpu.dot_dimension_numbers<[1], [0], [0], [1], [0, 0, 1, 1], [], []>} : vector<64x16xf32>, vector<16x32xf32>, vector<64x32xf32> -> vector<64x32xf32>
    %c0_4 = arith.constant 0 : index
    %c0_5 = arith.constant 0 : index
    %4 = vector.load %arg4[%c0_4, %c0_5] : memref<1x32xf32, #tpu.memory_space<vmem>>, vector<1x32xf32>
    %5 = vector.broadcast %4 : vector<1x32xf32> to vector<64x32xf32>
    %6 = arith.addf %3, %5 : vector<64x32xf32>
    %7 = vector.shape_cast %6 : vector<64x32xf32> to vector<8x8x32xf32>
    %c0_6 = arith.constant 0 : index
    %c0_7 = arith.constant 0 : index
    %c0_8 = arith.constant 0 : index
    %8 = vector.load %arg10[%c0_6, %c0_7, %c0_8] : memref<8x8x32xf32, #tpu.memory_space<vmem>>, vector<8x8x32xf32>
    tpu.vector_store %arg10[%c0_6, %c0_7, %c0_8], %7 {strides = array<i32>} : memref<8x8x32xf32, #tpu.memory_space<vmem>>, vector<8x8x32xf32>,
    %cst_9 = arith.constant 0.000000e+00 : f32
    %9 = vector.broadcast %cst_9 : f32 to vector<8x32xf32>
    %c0_i32 = arith.constant 0 : i32
    %10 = arith.index_cast %c0_i32 : i32 to index
    %c0_10 = arith.constant 0 : index
    %c0_11 = arith.constant 0 : index
    %11 = vector.load %arg10[%10, %c0_10, %c0_11] : memref<8x8x32xf32, #tpu.memory_space<vmem>>, vector<1x8x32xf32>
    %12 = vector.shape_cast %11 : vector<1x8x32xf32> to vector<8x32xf32>
    %c0_12 = arith.constant 0 : index
    %c0_13 = arith.constant 0 : index
    %13 = vector.load %arg3[%c0_12, %c0_13] : memref<32x32xf32, #tpu.memory_space<vmem>>, vector<32x32xf32>
    %cst_14 = arith.constant dense<0.000000e+00> : vector<8x32xf32>
    %14 = tpu.matmul %9, %13, %cst_14 {dimension_numbers = #tpu.dot_dimension_numbers<[1], [0], [0], [1], [0, 0, 1, 1], [], []>} : vector<8x32xf32>, vector<32x32xf32>, vector<8x32xf32> -> vector<8x32xf32>
    %15 = arith.addf %12, %14 : vector<8x32xf32>
    %16 = math.tanh %15 : vector<8x32xf32>
    %17 = tpu.concatenate %16, %9 in 1 : vector<8x32xf32>, vector<8x32xf32> -> vector<8x64xf32>
    %c0_15 = arith.constant 0 : index
    %c0_16 = arith.constant 0 : index
    %18 = vector.load %arg5[%c0_15, %c0_16] : memref<64x32xf32, #tpu.memory_space<vmem>>, vector<64x32xf32>
    %cst_17 = arith.constant dense<0.000000e+00> : vector<8x32xf32>
    %19 = tpu.matmul %17, %18, %cst_17 {dimension_numbers = #tpu.dot_dimension_numbers<[1], [0], [0], [1], [0, 0, 1, 1], [], []>} : vector<8x64xf32>, vector<64x32xf32>, vector<8x32xf32> -> vector<8x32xf32>
    %c0_18 = arith.constant 0 : index
    %c0_19 = arith.constant 0 : index
    %20 = vector.load %arg6[%c0_18, %c0_19] : memref<1x32xf32, #tpu.memory_space<vmem>>, vector<1x32xf32>
    %21 = vector.broadcast %20 : vector<1x32xf32> to vector<8x32xf32>
    %22 = arith.addf %19, %21 : vector<8x32xf32>
    %23 = math.tanh %22 : vector<8x32xf32>
    %24 = arith.index_cast %c0_i32 : i32 to index
    %c0_20 = arith.constant 0 : index
    %c0_21 = arith.constant 0 : index
    %25 = vector.load %arg11[%24, %c0_20, %c0_21] : memref<8x8x32xf32, #tpu.memory_space<vmem>>, vector<1x8x32xf32>
    %26 = vector.shape_cast %25 : vector<1x8x32xf32> to vector<8x32xf32>
    %27 = vector.shape_cast %23 : vector<8x32xf32> to vector<1x8x32xf32>
    tpu.vector_store %arg11[%24, %c0_20, %c0_21], %27 {strides = array<i32>} : memref<8x8x32xf32, #tpu.memory_space<vmem>>, vector<1x8x32xf32>,
    %c1_i32 = arith.constant 1 : i32
    %28 = arith.index_cast %c1_i32 : i32 to index
    %c0_22 = arith.constant 0 : index
    %c0_23 = arith.constant 0 : index
    %29 = vector.load %arg10[%28, %c0_22, %c0_23] : memref<8x8x32xf32, #tpu.memory_space<vmem>>, vector<1x8x32xf32>
    %30 = vector.shape_cast %29 : vector<1x8x32xf32> to vector<8x32xf32>
    %c0_24 = arith.constant 0 : index
    %c0_25 = arith.constant 0 : index
    %31 = vector.load %arg3[%c0_24, %c0_25] : memref<32x32xf32, #tpu.memory_space<vmem>>, vector<32x32xf32>
    %cst_26 = arith.constant dense<0.000000e+00> : vector<8x32xf32>
    %32 = tpu.matmul %16, %31, %cst_26 {dimension_numbers = #tpu.dot_dimension_numbers<[1], [0], [0], [1], [0, 0, 1, 1], [], []>} : vector<8x32xf32>, vector<32x32xf32>, vector<8x32xf32> -> vector<8x32xf32>
    %33 = arith.addf %30, %32 : vector<8x32xf32>
    %34 = math.tanh %33 : vector<8x32xf32>
    %35 = tpu.concatenate %34, %23 in 1 : vector<8x32xf32>, vector<8x32xf32> -> vector<8x64xf32>
    %c0_27 = arith.constant 0 : index
    %c0_28 = arith.constant 0 : index
    %36 = vector.load %arg5[%c0_27, %c0_28] : memref<64x32xf32, #tpu.memory_space<vmem>>, vector<64x32xf32>
    %cst_29 = arith.constant dense<0.000000e+00> : vector<8x32xf32>
    %37 = tpu.matmul %35, %36, %cst_29 {dimension_numbers = #tpu.dot_dimension_numbers<[1], [0], [0], [1], [0, 0, 1, 1], [], []>} : vector<8x64xf32>, vector<64x32xf32>, vector<8x32xf32> -> vector<8x32xf32>
    %c0_30 = arith.constant 0 : index
    %c0_31 = arith.constant 0 : index
    %38 = vector.load %arg6[%c0_30, %c0_31] : memref<1x32xf32, #tpu.memory_space<vmem>>, vector<1x32xf32>
    %39 = vector.broadcast %38 : vector<1x32xf32> to vector<8x32xf32>
    %40 = arith.addf %37, %39 : vector<8x32xf32>
    %41 = math.tanh %40 : vector<8x32xf32>
    %42 = arith.index_cast %c1_i32 : i32 to index
    %c0_32 = arith.constant 0 : index
    %c0_33 = arith.constant 0 : index
    %43 = vector.load %arg11[%42, %c0_32, %c0_33] : memref<8x8x32xf32, #tpu.memory_space<vmem>>, vector<1x8x32xf32>
    %44 = vector.shape_cast %43 : vector<1x8x32xf32> to vector<8x32xf32>
    %45 = vector.shape_cast %41 : vector<8x32xf32> to vector<1x8x32xf32>
    tpu.vector_store %arg11[%42, %c0_32, %c0_33], %45 {strides = array<i32>} : memref<8x8x32xf32, #tpu.memory_space<vmem>>, vector<1x8x32xf32>,
    %c2_i32 = arith.constant 2 : i32
    %46 = arith.index_cast %c2_i32 : i32 to index
    %c0_34 = arith.constant 0 : index
    %c0_35 = arith.constant 0 : index
    %47 = vector.load %arg10[%46, %c0_34, %c0_35] : memref<8x8x32xf32, #tpu.memory_space<vmem>>, vector<1x8x32xf32>
    %48 = vector.shape_cast %47 : vector<1x8x32xf32> to vector<8x32xf32>
    %c0_36 = arith.constant 0 : index
    %c0_37 = arith.constant 0 : index
    %49 = vector.load %arg3[%c0_36, %c0_37] : memref<32x32xf32, #tpu.memory_space<vmem>>, vector<32x32xf32>
    %cst_38 = arith.constant dense<0.000000e+00> : vector<8x32xf32>
    %50 = tpu.matmul %34, %49, %cst_38 {dimension_numbers = #tpu.dot_dimension_numbers<[1], [0], [0], [1], [0, 0, 1, 1], [], []>} : vector<8x32xf32>, vector<32x32xf32>, vector<8x32xf32> -> vector<8x32xf32>
    %51 = arith.addf %48, %50 : vector<8x32xf32>
    %52 = math.tanh %51 : vector<8x32xf32>
    %53 = tpu.concatenate %52, %41 in 1 : vector<8x32xf32>, vector<8x32xf32> -> vector<8x64xf32>
    %c0_39 = arith.constant 0 : index
    %c0_40 = arith.constant 0 : index
    %54 = vector.load %arg5[%c0_39, %c0_40] : memref<64x32xf32, #tpu.memory_space<vmem>>, vector<64x32xf32>
    %cst_41 = arith.constant dense<0.000000e+00> : vector<8x32xf32>
    %55 = tpu.matmul %53, %54, %cst_41 {dimension_numbers = #tpu.dot_dimension_numbers<[1], [0], [0], [1], [0, 0, 1, 1], [], []>} : vector<8x64xf32>, vector<64x32xf32>, vector<8x32xf32> -> vector<8x32xf32>
    %c0_42 = arith.constant 0 : index
    %c0_43 = arith.constant 0 : index
    %56 = vector.load %arg6[%c0_42, %c0_43] : memref<1x32xf32, #tpu.memory_space<vmem>>, vector<1x32xf32>
    %57 = vector.broadcast %56 : vector<1x32xf32> to vector<8x32xf32>
    %58 = arith.addf %55, %57 : vector<8x32xf32>
    %59 = math.tanh %58 : vector<8x32xf32>
    %60 = arith.index_cast %c2_i32 : i32 to index
    %c0_44 = arith.constant 0 : index
    %c0_45 = arith.constant 0 : index
    %61 = vector.load %arg11[%60, %c0_44, %c0_45] : memref<8x8x32xf32, #tpu.memory_space<vmem>>, vector<1x8x32xf32>
    %62 = vector.shape_cast %61 : vector<1x8x32xf32> to vector<8x32xf32>
    %63 = vector.shape_cast %59 : vector<8x32xf32> to vector<1x8x32xf32>
    tpu.vector_store %arg11[%60, %c0_44, %c0_45], %63 {strides = array<i32>} : memref<8x8x32xf32, #tpu.memory_space<vmem>>, vector<1x8x32xf32>,
    %c3_i32 = arith.constant 3 : i32
    %64 = arith.index_cast %c3_i32 : i32 to index
    %c0_46 = arith.constant 0 : index
    %c0_47 = arith.constant 0 : index
    %65 = vector.load %arg10[%64, %c0_46, %c0_47] : memref<8x8x32xf32, #tpu.memory_space<vmem>>, vector<1x8x32xf32>
    %66 = vector.shape_cast %65 : vector<1x8x32xf32> to vector<8x32xf32>
    %c0_48 = arith.constant 0 : index
    %c0_49 = arith.constant 0 : index
    %67 = vector.load %arg3[%c0_48, %c0_49] : memref<32x32xf32, #tpu.memory_space<vmem>>, vector<32x32xf32>
    %cst_50 = arith.constant dense<0.000000e+00> : vector<8x32xf32>
    %68 = tpu.matmul %52, %67, %cst_50 {dimension_numbers = #tpu.dot_dimension_numbers<[1], [0], [0], [1], [0, 0, 1, 1], [], []>} : vector<8x32xf32>, vector<32x32xf32>, vector<8x32xf32> -> vector<8x32xf32>
    %69 = arith.addf %66, %68 : vector<8x32xf32>
    %70 = math.tanh %69 : vector<8x32xf32>
    %71 = tpu.concatenate %70, %59 in 1 : vector<8x32xf32>, vector<8x32xf32> -> vector<8x64xf32>
    %c0_51 = arith.constant 0 : index
    %c0_52 = arith.constant 0 : index
    %72 = vector.load %arg5[%c0_51, %c0_52] : memref<64x32xf32, #tpu.memory_space<vmem>>, vector<64x32xf32>
    %cst_53 = arith.constant dense<0.000000e+00> : vector<8x32xf32>
    %73 = tpu.matmul %71, %72, %cst_53 {dimension_numbers = #tpu.dot_dimension_numbers<[1], [0], [0], [1], [0, 0, 1, 1], [], []>} : vector<8x64xf32>, vector<64x32xf32>, vector<8x32xf32> -> vector<8x32xf32>
    %c0_54 = arith.constant 0 : index
    %c0_55 = arith.constant 0 : index
    %74 = vector.load %arg6[%c0_54, %c0_55] : memref<1x32xf32, #tpu.memory_space<vmem>>, vector<1x32xf32>
    %75 = vector.broadcast %74 : vector<1x32xf32> to vector<8x32xf32>
    %76 = arith.addf %73, %75 : vector<8x32xf32>
    %77 = math.tanh %76 : vector<8x32xf32>
    %78 = arith.index_cast %c3_i32 : i32 to index
    %c0_56 = arith.constant 0 : index
    %c0_57 = arith.constant 0 : index
    %79 = vector.load %arg11[%78, %c0_56, %c0_57] : memref<8x8x32xf32, #tpu.memory_space<vmem>>, vector<1x8x32xf32>
    %80 = vector.shape_cast %79 : vector<1x8x32xf32> to vector<8x32xf32>
    %81 = vector.shape_cast %77 : vector<8x32xf32> to vector<1x8x32xf32>
    tpu.vector_store %arg11[%78, %c0_56, %c0_57], %81 {strides = array<i32>} : memref<8x8x32xf32, #tpu.memory_space<vmem>>, vector<1x8x32xf32>,
    %c4_i32 = arith.constant 4 : i32
    %82 = arith.index_cast %c4_i32 : i32 to index
    %c0_58 = arith.constant 0 : index
    %c0_59 = arith.constant 0 : index
    %83 = vector.load %arg10[%82, %c0_58, %c0_59] : memref<8x8x32xf32, #tpu.memory_space<vmem>>, vector<1x8x32xf32>
    %84 = vector.shape_cast %83 : vector<1x8x32xf32> to vector<8x32xf32>
    %c0_60 = arith.constant 0 : index
    %c0_61 = arith.constant 0 : index
    %85 = vector.load %arg3[%c0_60, %c0_61] : memref<32x32xf32, #tpu.memory_space<vmem>>, vector<32x32xf32>
    %cst_62 = arith.constant dense<0.000000e+00> : vector<8x32xf32>
    %86 = tpu.matmul %70, %85, %cst_62 {dimension_numbers = #tpu.dot_dimension_numbers<[1], [0], [0], [1], [0, 0, 1, 1], [], []>} : vector<8x32xf32>, vector<32x32xf32>, vector<8x32xf32> -> vector<8x32xf32>
    %87 = arith.addf %84, %86 : vector<8x32xf32>
    %88 = math.tanh %87 : vector<8x32xf32>
    %89 = tpu.concatenate %88, %77 in 1 : vector<8x32xf32>, vector<8x32xf32> -> vector<8x64xf32>
    %c0_63 = arith.constant 0 : index
    %c0_64 = arith.constant 0 : index
    %90 = vector.load %arg5[%c0_63, %c0_64] : memref<64x32xf32, #tpu.memory_space<vmem>>, vector<64x32xf32>
    %cst_65 = arith.constant dense<0.000000e+00> : vector<8x32xf32>
    %91 = tpu.matmul %89, %90, %cst_65 {dimension_numbers = #tpu.dot_dimension_numbers<[1], [0], [0], [1], [0, 0, 1, 1], [], []>} : vector<8x64xf32>, vector<64x32xf32>, vector<8x32xf32> -> vector<8x32xf32>
    %c0_66 = arith.constant 0 : index
    %c0_67 = arith.constant 0 : index
    %92 = vector.load %arg6[%c0_66, %c0_67] : memref<1x32xf32, #tpu.memory_space<vmem>>, vector<1x32xf32>
    %93 = vector.broadcast %92 : vector<1x32xf32> to vector<8x32xf32>
    %94 = arith.addf %91, %93 : vector<8x32xf32>
    %95 = math.tanh %94 : vector<8x32xf32>
    %96 = arith.index_cast %c4_i32 : i32 to index
    %c0_68 = arith.constant 0 : index
    %c0_69 = arith.constant 0 : index
    %97 = vector.load %arg11[%96, %c0_68, %c0_69] : memref<8x8x32xf32, #tpu.memory_space<vmem>>, vector<1x8x32xf32>
    %98 = vector.shape_cast %97 : vector<1x8x32xf32> to vector<8x32xf32>
    %99 = vector.shape_cast %95 : vector<8x32xf32> to vector<1x8x32xf32>
    tpu.vector_store %arg11[%96, %c0_68, %c0_69], %99 {strides = array<i32>} : memref<8x8x32xf32, #tpu.memory_space<vmem>>, vector<1x8x32xf32>,
    %c5_i32 = arith.constant 5 : i32
    %100 = arith.index_cast %c5_i32 : i32 to index
    %c0_70 = arith.constant 0 : index
    %c0_71 = arith.constant 0 : index
    %101 = vector.load %arg10[%100, %c0_70, %c0_71] : memref<8x8x32xf32, #tpu.memory_space<vmem>>, vector<1x8x32xf32>
    %102 = vector.shape_cast %101 : vector<1x8x32xf32> to vector<8x32xf32>
    %c0_72 = arith.constant 0 : index
    %c0_73 = arith.constant 0 : index
    %103 = vector.load %arg3[%c0_72, %c0_73] : memref<32x32xf32, #tpu.memory_space<vmem>>, vector<32x32xf32>
    %cst_74 = arith.constant dense<0.000000e+00> : vector<8x32xf32>
    %104 = tpu.matmul %88, %103, %cst_74 {dimension_numbers = #tpu.dot_dimension_numbers<[1], [0], [0], [1], [0, 0, 1, 1], [], []>} : vector<8x32xf32>, vector<32x32xf32>, vector<8x32xf32> -> vector<8x32xf32>
    %105 = arith.addf %102, %104 : vector<8x32xf32>
    %106 = math.tanh %105 : vector<8x32xf32>
    %107 = tpu.concatenate %106, %95 in 1 : vector<8x32xf32>, vector<8x32xf32> -> vector<8x64xf32>
    %c0_75 = arith.constant 0 : index
    %c0_76 = arith.constant 0 : index
    %108 = vector.load %arg5[%c0_75, %c0_76] : memref<64x32xf32, #tpu.memory_space<vmem>>, vector<64x32xf32>
    %cst_77 = arith.constant dense<0.000000e+00> : vector<8x32xf32>
    %109 = tpu.matmul %107, %108, %cst_77 {dimension_numbers = #tpu.dot_dimension_numbers<[1], [0], [0], [1], [0, 0, 1, 1], [], []>} : vector<8x64xf32>, vector<64x32xf32>, vector<8x32xf32> -> vector<8x32xf32>
    %c0_78 = arith.constant 0 : index
    %c0_79 = arith.constant 0 : index
    %110 = vector.load %arg6[%c0_78, %c0_79] : memref<1x32xf32, #tpu.memory_space<vmem>>, vector<1x32xf32>
    %111 = vector.broadcast %110 : vector<1x32xf32> to vector<8x32xf32>
    %112 = arith.addf %109, %111 : vector<8x32xf32>
    %113 = math.tanh %112 : vector<8x32xf32>
    %114 = arith.index_cast %c5_i32 : i32 to index
    %c0_80 = arith.constant 0 : index
    %c0_81 = arith.constant 0 : index
    %115 = vector.load %arg11[%114, %c0_80, %c0_81] : memref<8x8x32xf32, #tpu.memory_space<vmem>>, vector<1x8x32xf32>
    %116 = vector.shape_cast %115 : vector<1x8x32xf32> to vector<8x32xf32>
    %117 = vector.shape_cast %113 : vector<8x32xf32> to vector<1x8x32xf32>
    tpu.vector_store %arg11[%114, %c0_80, %c0_81], %117 {strides = array<i32>} : memref<8x8x32xf32, #tpu.memory_space<vmem>>, vector<1x8x32xf32>,
    %c6_i32 = arith.constant 6 : i32
    %118 = arith.index_cast %c6_i32 : i32 to index
    %c0_82 = arith.constant 0 : index
    %c0_83 = arith.constant 0 : index
    %119 = vector.load %arg10[%118, %c0_82, %c0_83] : memref<8x8x32xf32, #tpu.memory_space<vmem>>, vector<1x8x32xf32>
    %120 = vector.shape_cast %119 : vector<1x8x32xf32> to vector<8x32xf32>
    %c0_84 = arith.constant 0 : index
    %c0_85 = arith.constant 0 : index
    %121 = vector.load %arg3[%c0_84, %c0_85] : memref<32x32xf32, #tpu.memory_space<vmem>>, vector<32x32xf32>
    %cst_86 = arith.constant dense<0.000000e+00> : vector<8x32xf32>
    %122 = tpu.matmul %106, %121, %cst_86 {dimension_numbers = #tpu.dot_dimension_numbers<[1], [0], [0], [1], [0, 0, 1, 1], [], []>} : vector<8x32xf32>, vector<32x32xf32>, vector<8x32xf32> -> vector<8x32xf32>
    %123 = arith.addf %120, %122 : vector<8x32xf32>
    %124 = math.tanh %123 : vector<8x32xf32>
    %125 = tpu.concatenate %124, %113 in 1 : vector<8x32xf32>, vector<8x32xf32> -> vector<8x64xf32>
    %c0_87 = arith.constant 0 : index
    %c0_88 = arith.constant 0 : index
    %126 = vector.load %arg5[%c0_87, %c0_88] : memref<64x32xf32, #tpu.memory_space<vmem>>, vector<64x32xf32>
    %cst_89 = arith.constant dense<0.000000e+00> : vector<8x32xf32>
    %127 = tpu.matmul %125, %126, %cst_89 {dimension_numbers = #tpu.dot_dimension_numbers<[1], [0], [0], [1], [0, 0, 1, 1], [], []>} : vector<8x64xf32>, vector<64x32xf32>, vector<8x32xf32> -> vector<8x32xf32>
    %c0_90 = arith.constant 0 : index
    %c0_91 = arith.constant 0 : index
    %128 = vector.load %arg6[%c0_90, %c0_91] : memref<1x32xf32, #tpu.memory_space<vmem>>, vector<1x32xf32>
    %129 = vector.broadcast %128 : vector<1x32xf32> to vector<8x32xf32>
    %130 = arith.addf %127, %129 : vector<8x32xf32>
    %131 = math.tanh %130 : vector<8x32xf32>
    %132 = arith.index_cast %c6_i32 : i32 to index
    %c0_92 = arith.constant 0 : index
    %c0_93 = arith.constant 0 : index
    %133 = vector.load %arg11[%132, %c0_92, %c0_93] : memref<8x8x32xf32, #tpu.memory_space<vmem>>, vector<1x8x32xf32>
    %134 = vector.shape_cast %133 : vector<1x8x32xf32> to vector<8x32xf32>
    %135 = vector.shape_cast %131 : vector<8x32xf32> to vector<1x8x32xf32>
    tpu.vector_store %arg11[%132, %c0_92, %c0_93], %135 {strides = array<i32>} : memref<8x8x32xf32, #tpu.memory_space<vmem>>, vector<1x8x32xf32>,
    %c7_i32 = arith.constant 7 : i32
    %136 = arith.index_cast %c7_i32 : i32 to index
    %c0_94 = arith.constant 0 : index
    %c0_95 = arith.constant 0 : index
    %137 = vector.load %arg10[%136, %c0_94, %c0_95] : memref<8x8x32xf32, #tpu.memory_space<vmem>>, vector<1x8x32xf32>
    %138 = vector.shape_cast %137 : vector<1x8x32xf32> to vector<8x32xf32>
    %c0_96 = arith.constant 0 : index
    %c0_97 = arith.constant 0 : index
    %139 = vector.load %arg3[%c0_96, %c0_97] : memref<32x32xf32, #tpu.memory_space<vmem>>, vector<32x32xf32>
    %cst_98 = arith.constant dense<0.000000e+00> : vector<8x32xf32>
    %140 = tpu.matmul %124, %139, %cst_98 {dimension_numbers = #tpu.dot_dimension_numbers<[1], [0], [0], [1], [0, 0, 1, 1], [], []>} : vector<8x32xf32>, vector<32x32xf32>, vector<8x32xf32> -> vector<8x32xf32>
    %141 = arith.addf %138, %140 : vector<8x32xf32>
    %142 = math.tanh %141 : vector<8x32xf32>
    %143 = tpu.concatenate %142, %131 in 1 : vector<8x32xf32>, vector<8x32xf32> -> vector<8x64xf32>
    %c0_99 = arith.constant 0 : index
    %c0_100 = arith.constant 0 : index
    %144 = vector.load %arg5[%c0_99, %c0_100] : memref<64x32xf32, #tpu.memory_space<vmem>>, vector<64x32xf32>
    %cst_101 = arith.constant dense<0.000000e+00> : vector<8x32xf32>
    %145 = tpu.matmul %143, %144, %cst_101 {dimension_numbers = #tpu.dot_dimension_numbers<[1], [0], [0], [1], [0, 0, 1, 1], [], []>} : vector<8x64xf32>, vector<64x32xf32>, vector<8x32xf32> -> vector<8x32xf32>
    %c0_102 = arith.constant 0 : index
    %c0_103 = arith.constant 0 : index
    %146 = vector.load %arg6[%c0_102, %c0_103] : memref<1x32xf32, #tpu.memory_space<vmem>>, vector<1x32xf32>
    %147 = vector.broadcast %146 : vector<1x32xf32> to vector<8x32xf32>
    %148 = arith.addf %145, %147 : vector<8x32xf32>
    %149 = math.tanh %148 : vector<8x32xf32>
    %150 = arith.index_cast %c7_i32 : i32 to index
    %c0_104 = arith.constant 0 : index
    %c0_105 = arith.constant 0 : index
    %151 = vector.load %arg11[%150, %c0_104, %c0_105] : memref<8x8x32xf32, #tpu.memory_space<vmem>>, vector<1x8x32xf32>
    %152 = vector.shape_cast %151 : vector<1x8x32xf32> to vector<8x32xf32>
    %153 = vector.shape_cast %149 : vector<8x32xf32> to vector<1x8x32xf32>
    tpu.vector_store %arg11[%150, %c0_104, %c0_105], %153 {strides = array<i32>} : memref<8x8x32xf32, #tpu.memory_space<vmem>>, vector<1x8x32xf32>,
    %c8_i32 = arith.constant 8 : i32
    %c0_106 = arith.constant 0 : index
    %c0_107 = arith.constant 0 : index
    %c0_108 = arith.constant 0 : index
    %154 = vector.load %arg11[%c0_106, %c0_107, %c0_108] : memref<8x8x32xf32, #tpu.memory_space<vmem>>, vector<8x8x32xf32>
    %155 = vector.shape_cast %154 : vector<8x8x32xf32> to vector<64x32xf32>
    %c0_109 = arith.constant 0 : index
    %c0_110 = arith.constant 0 : index
    %156 = vector.load %arg7[%c0_109, %c0_110] : memref<32x8xf32, #tpu.memory_space<vmem>>, vector<32x8xf32>
    %cst_111 = arith.constant dense<0.000000e+00> : vector<64x8xf32>
    %157 = tpu.matmul %155, %156, %cst_111 {dimension_numbers = #tpu.dot_dimension_numbers<[1], [0], [0], [1], [0, 0, 1, 1], [], []>} : vector<64x32xf32>, vector<32x8xf32>, vector<64x8xf32> -> vector<64x8xf32>
    %c0_112 = arith.constant 0 : index
    %c0_113 = arith.constant 0 : index
    %158 = vector.load %arg8[%c0_112, %c0_113] : memref<1x8xf32, #tpu.memory_space<vmem>>, vector<1x8xf32>
    %159 = vector.broadcast %158 : vector<1x8xf32> to vector<64x8xf32>
    %160 = arith.addf %157, %159 : vector<64x8xf32>
    %cst_114 = arith.constant dense<0xFF800000> : vector<64xf32>
    %161 = vector.multi_reduction <maximumf>, %160, %cst_114 [1] : vector<64x8xf32> to vector<64xf32>
    %162 = vector.shape_cast %161 : vector<64xf32> to vector<64x1xf32>
    %163 = vector.broadcast %162 : vector<64x1xf32> to vector<64x8xf32>
    %164 = arith.subf %160, %163 : vector<64x8xf32>
    %165 = math.exp %164 : vector<64x8xf32>
    %cst_115 = arith.constant dense<0.000000e+00> : vector<64xf32>
    %166 = vector.multi_reduction <add>, %165, %cst_115 [1] : vector<64x8xf32> to vector<64xf32>
    %167 = vector.shape_cast %166 : vector<64xf32> to vector<64x1xf32>
    %168 = math.log %167 : vector<64x1xf32>
    %169 = vector.broadcast %168 : vector<64x1xf32> to vector<64x8xf32>
    %170 = arith.subf %164, %169 : vector<64x8xf32>
    %171 = vector.shape_cast %170 : vector<64x8xf32> to vector<8x8x8xf32>
    %c0_116 = arith.constant 0 : index
    %c0_117 = arith.constant 0 : index
    %c0_118 = arith.constant 0 : index
    %172 = vector.load %arg9[%c0_116, %c0_117, %c0_118] : memref<8x8x8xf32, #tpu.memory_space<vmem>>, vector<8x8x8xf32>
    tpu.vector_store %arg9[%c0_116, %c0_117, %c0_118], %171 {strides = array<i32>} : memref<8x8x8xf32, #tpu.memory_space<vmem>>, vector<8x8x8xf32>,
    return
  }
  func.func @transform_0(%arg0: i32) -> (i32, i32, i32) {
    %c0_i32 = arith.constant 0 : i32
    %c0_i32_0 = arith.constant 0 : i32
    %c0_i32_1 = arith.constant 0 : i32
    return %c0_i32, %arg0, %c0_i32_0 : i32, i32, i32
  }
  func.func @transform_1(%arg0: i32) -> (i32, i32) {
    %c0_i32 = arith.constant 0 : i32
    %c0_i32_0 = arith.constant 0 : i32
    %c0_i32_1 = arith.constant 0 : i32
    return %c0_i32, %c0_i32_0 : i32, i32
  }
  func.func @transform_2(%arg0: i32) -> (i32, i32) {
    %c0_i32 = arith.constant 0 : i32
    %c0_i32_0 = arith.constant 0 : i32
    %c0_i32_1 = arith.constant 0 : i32
    return %c0_i32, %c0_i32_0 : i32, i32
  }
  func.func @transform_3(%arg0: i32) -> (i32, i32) {
    %c0_i32 = arith.constant 0 : i32
    %c0_i32_0 = arith.constant 0 : i32
    %c0_i32_1 = arith.constant 0 : i32
    return %c0_i32, %c0_i32_0 : i32, i32
  }
  func.func @transform_4(%arg0: i32) -> (i32, i32) {
    %c0_i32 = arith.constant 0 : i32
    %c0_i32_0 = arith.constant 0 : i32
    %c0_i32_1 = arith.constant 0 : i32
    return %c0_i32, %c0_i32_0 : i32, i32
  }
  func.func @transform_5(%arg0: i32) -> (i32, i32) {
    %c0_i32 = arith.constant 0 : i32
    %c0_i32_0 = arith.constant 0 : i32
    %c0_i32_1 = arith.constant 0 : i32
    return %c0_i32, %c0_i32_0 : i32, i32
  }
  func.func @transform_6(%arg0: i32) -> (i32, i32) {
    %c0_i32 = arith.constant 0 : i32
    %c0_i32_0 = arith.constant 0 : i32
    %c0_i32_1 = arith.constant 0 : i32
    return %c0_i32, %c0_i32_0 : i32, i32
  }
  func.func @transform_7(%arg0: i32) -> (i32, i32) {
    %c0_i32 = arith.constant 0 : i32
    %c0_i32_0 = arith.constant 0 : i32
    %c0_i32_1 = arith.constant 0 : i32
    return %c0_i32, %c0_i32_0 : i32, i32
  }
  func.func @transform_8(%arg0: i32) -> (i32, i32, i32) {
    %c0_i32 = arith.constant 0 : i32
    %c0_i32_0 = arith.constant 0 : i32
    %c0_i32_1 = arith.constant 0 : i32
    return %c0_i32, %arg0, %c0_i32_0 : i32, i32, i32
  }
}

</mosaic_0001>

<llo_original>
// kernel: tpu_custom_call.1
$region0: #{tpu_custom_call.1}
  #allocation0 [shape = 'u32[]', space=smem, size = 0x4, offset = 0x4, fixed_abs, tag = 'smem constant byte address 0x4 - core index']
  #allocation1 [shape = 'u32[72,128]{1,0:T(1,128)}', space=vmem, size = 0x9000, scoped, tag = 'internal scratch']
  #allocation2 [shape = 'f32[8,8,32]{2,1,0:T(8,128)}', space=vmem, size = 0x8000, scoped, tag = 'scratch operand']
  #allocation3 [shape = 'f32[8,8,32]{2,1,0:T(8,128)}', space=vmem, size = 0x8000, scoped, tag = 'scratch operand']
  %s0 = inlined_call_operand.hbm [shape: f32[8,16,16], index: 0, kind: input, shape index: {}]
  %s1 = inlined_call_operand.vmem [shape: f32[16,32], index: 1, kind: input, shape index: {}]
  %s2 = inlined_call_operand.vmem [shape: f32[32,32], index: 2, kind: input, shape index: {}]
  %s3 = inlined_call_operand.vmem [shape: f32[1,32], index: 3, kind: input, shape index: {}]
  %s4 = inlined_call_operand.vmem [shape: f32[64,32], index: 4, kind: input, shape index: {}]
  %s5 = inlined_call_operand.vmem [shape: f32[1,32], index: 5, kind: input, shape index: {}]
  %s6 = inlined_call_operand.vmem [shape: f32[32,8], index: 6, kind: input, shape index: {}]
  %s7 = inlined_call_operand.vmem [shape: f32[1,8], index: 7, kind: input, shape index: {}]
  %s8 = inlined_call_operand.vmem [shape: f32[8,16,8], index: 8, kind: output, shape index: {}]
  %s9 = sld [smem:[#allocation0]]
  $region103: #{tpu_custom_call.1} parent=0
    _
  %s11 = ssub.s32 1, %s9
  %s12 = scalar_select 0, %s11, %s9
  $region1: #{tpu_custom_call.1} parent=0
    #allocation4 [shape = 'u8[65536]{0}', space=vmem, size = 0x10000, scoped, tag = 'input window, operand 0']
    #allocation5 [shape = 's32[2]{0}', space=sflag, size = 0x8, scoped, tag = 'scoped memory for tpu_custom_call.1']
    #allocation6 [shape = 'u8[65536]{0}', space=vmem, size = 0x10000, scoped, tag = 'output window, operand 0']
    %13 = vsyncpa [#allocation5], 0
    %s14 = scalar_lea.sflag [#allocation5], 1
    %15 = vsyncpa %s14, 0
    loop: start=0, step=1, limit=4
    $region2: #{tpu_custom_call.1} parent=1 // loop_pre_header
      _
    $region3: #{tpu_custom_call.1} parent=1 // loop_header
      %s17 = sphi 0, %s21
      %p18 = scmp.ge.s32.totalorder %s17, 4
      %s27 = sphi 0, %s29
      %s30 = sphi 0, %s27
      %s31 = sphi 0, %s30
      %s47 = sphi 0, %s31
      %s51 = sphi 0, %s51
      %s53 = sphi 0, %s51
      %s54 = sphi 0, %s53
      %s68 = sphi 0, %s54
      %s72 = sphi 0, %s72
      %s74 = sphi 0, %s72
      %s75 = sphi 0, %s74
      %s89 = sphi 0, %s75
      %s93 = sphi 0, %s93
      %s95 = sphi 0, %s93
      %s96 = sphi 0, %s95
      %s110 = sphi 0, %s96
      %s114 = sphi 0, %s114
      %s116 = sphi 0, %s114
      %s117 = sphi 0, %s116
      %s131 = sphi 0, %s117
      %s135 = sphi 0, %s135
      %s137 = sphi 0, %s135
      %s138 = sphi 0, %s137
      %s152 = sphi 0, %s138
      %s156 = sphi 0, %s156
      %s158 = sphi 0, %s156
      %s159 = sphi 0, %s158
      %s173 = sphi 0, %s159
      %s177 = sphi 0, %s177
      %s179 = sphi 0, %s177
      %s180 = sphi 0, %s179
      %s194 = sphi 0, %s180
      %s200 = sphi 0, %s202
      %s203 = sphi 0, %s200
      %s204 = sphi 0, %s203
      %s220 = sphi 0, %s204
    $region4: #{tpu_custom_call.1} parent=1 // loop_header_branch
      %20 = sbr.rel (%p18) target = $region8
    $region5: #{tpu_custom_call.1} parent=1 // loop_body
      %s22 = ssub.s32 %s17, 1
      %s23 = ssub.s32 %s17, 2
      %s24 = sadd.s32 %s17, 1
      %s25 = ssub.s32 %s17, %s24
      %p26 = scmp.eq.s32.totalorder %s25, 0
      %s28 = sadd.s32 %s27, 1
      %s29 = scalar_select %p26, %s27, %s28
      %p32 = pneg %p26
      %p33 = scmp.eq.s32.totalorder %s17, 1
      %p34 = por %p32, %p33
      %p35 = scmp.ne.s32.totalorder %s27, %s30
      %p36 = scmp.eq.s32.totalorder %s17, 0
      %p37 = por %p35, %p36
      %p38 = scmp.ne.s32.totalorder %s27, %s30
      %p39 = scmp.eq.s32.totalorder %s22, 1
      %p40 = por %p38, %p39
      %p41 = scmp.ne.s32.totalorder %s30, %s31
      %p42 = scmp.eq.s32.totalorder %s22, 0
      %p43 = por %p41, %p42
      %p44 = scmp.ne.s32.totalorder %s30, %s31
      %p45 = scmp.eq.s32.totalorder %s23, 1
      %p46 = por %p44, %p45
      %p48 = scmp.ne.s32.totalorder %s31, %s47
      %p49 = scmp.eq.s32.totalorder %s23, 0
      %p50 = por %p48, %p49
      %s52 = sadd.s32 %s51, 1
      %p55 = scmp.eq.s32.totalorder %s17, 1
      %p56 = scmp.ne.s32.totalorder %s51, %s53
      %p57 = scmp.eq.s32.totalorder %s17, 0
      %p58 = por %p56, %p57
      %p59 = scmp.ne.s32.totalorder %s51, %s53
      %p60 = scmp.eq.s32.totalorder %s22, 1
      %p61 = por %p59, %p60
      %p62 = scmp.ne.s32.totalorder %s53, %s54
      %p63 = scmp.eq.s32.totalorder %s22, 0
      %p64 = por %p62, %p63
      %p65 = scmp.ne.s32.totalorder %s53, %s54
      %p66 = scmp.eq.s32.totalorder %s23, 1
      %p67 = por %p65, %p66
      %p69 = scmp.ne.s32.totalorder %s54, %s68
      %p70 = scmp.eq.s32.totalorder %s23, 0
      %p71 = por %p69, %p70
      %s73 = sadd.s32 %s72, 1
      %p76 = scmp.eq.s32.totalorder %s17, 1
      %p77 = scmp.ne.s32.totalorder %s72, %s74
      %p78 = scmp.eq.s32.totalorder %s17, 0
      %p79 = por %p77, %p78
      %p80 = scmp.ne.s32.totalorder %s72, %s74
      %p81 = scmp.eq.s32.totalorder %s22, 1
      %p82 = por %p80, %p81
      %p83 = scmp.ne.s32.totalorder %s74, %s75
      %p84 = scmp.eq.s32.totalorder %s22, 0
      %p85 = por %p83, %p84
      %p86 = scmp.ne.s32.totalorder %s74, %s75
      %p87 = scmp.eq.s32.totalorder %s23, 1
      %p88 = por %p86, %p87
      %p90 = scmp.ne.s32.totalorder %s75, %s89
      %p91 = scmp.eq.s32.totalorder %s23, 0
      %p92 = por %p90, %p91
      %s94 = sadd.s32 %s93, 1
      %p97 = scmp.eq.s32.totalorder %s17, 1
      %p98 = scmp.ne.s32.totalorder %s93, %s95
      %p99 = scmp.eq.s32.totalorder %s17, 0
      %p100 = por %p98, %p99
      %p101 = scmp.ne.s32.totalorder %s93, %s95
      %p102 = scmp.eq.s32.totalorder %s22, 1
      %p103 = por %p101, %p102
      %p104 = scmp.ne.s32.totalorder %s95, %s96
      %p105 = scmp.eq.s32.totalorder %s22, 0
      %p106 = por %p104, %p105
      %p107 = scmp.ne.s32.totalorder %s95, %s96
      %p108 = scmp.eq.s32.totalorder %s23, 1
      %p109 = por %p107, %p108
      %p111 = scmp.ne.s32.totalorder %s96, %s110
      %p112 = scmp.eq.s32.totalorder %s23, 0
      %p113 = por %p111, %p112
      %s115 = sadd.s32 %s114, 1
      %p118 = scmp.eq.s32.totalorder %s17, 1
      %p119 = scmp.ne.s32.totalorder %s114, %s116
      %p120 = scmp.eq.s32.totalorder %s17, 0
      %p121 = por %p119, %p120
      %p122 = scmp.ne.s32.totalorder %s114, %s116
      %p123 = scmp.eq.s32.totalorder %s22, 1
      %p124 = por %p122, %p123
      %p125 = scmp.ne.s32.totalorder %s116, %s117
      %p126 = scmp.eq.s32.totalorder %s22, 0
      %p127 = por %p125, %p126
      %p128 = scmp.ne.s32.totalorder %s116, %s117
      %p129 = scmp.eq.s32.totalorder %s23, 1
      %p130 = por %p128, %p129
      %p132 = scmp.ne.s32.totalorder %s117, %s131
      %p133 = scmp.eq.s32.totalorder %s23, 0
      %p134 = por %p132, %p133
      %s136 = sadd.s32 %s135, 1
      %p139 = scmp.eq.s32.totalorder %s17, 1
      %p140 = scmp.ne.s32.totalorder %s135, %s137
      %p141 = scmp.eq.s32.totalorder %s17, 0
      %p142 = por %p140, %p141
      %p143 = scmp.ne.s32.totalorder %s135, %s137
      %p144 = scmp.eq.s32.totalorder %s22, 1
      %p145 = por %p143, %p144
      %p146 = scmp.ne.s32.totalorder %s137, %s138
      %p147 = scmp.eq.s32.totalorder %s22, 0
      %p148 = por %p146, %p147
      %p149 = scmp.ne.s32.totalorder %s137, %s138
      %p150 = scmp.eq.s32.totalorder %s23, 1
      %p151 = por %p149, %p150
      %p153 = scmp.ne.s32.totalorder %s138, %s152
      %p154 = scmp.eq.s32.totalorder %s23, 0
      %p155 = por %p153, %p154
      %s157 = sadd.s32 %s156, 1
      %p160 = scmp.eq.s32.totalorder %s17, 1
      %p161 = scmp.ne.s32.totalorder %s156, %s158
      %p162 = scmp.eq.s32.totalorder %s17, 0
      %p163 = por %p161, %p162
      %p164 = scmp.ne.s32.totalorder %s156, %s158
      %p165 = scmp.eq.s32.totalorder %s22, 1
      %p166 = por %p164, %p165
      %p167 = scmp.ne.s32.totalorder %s158, %s159
      %p168 = scmp.eq.s32.totalorder %s22, 0
      %p169 = por %p167, %p168
      %p170 = scmp.ne.s32.totalorder %s158, %s159
      %p171 = scmp.eq.s32.totalorder %s23, 1
      %p172 = por %p170, %p171
      %p174 = scmp.ne.s32.totalorder %s159, %s173
      %p175 = scmp.eq.s32.totalorder %s23, 0
      %p176 = por %p174, %p175
      %s178 = sadd.s32 %s177, 1
      %p181 = scmp.eq.s32.totalorder %s17, 1
      %p182 = scmp.ne.s32.totalorder %s177, %s179
      %p183 = scmp.eq.s32.totalorder %s17, 0
      %p184 = por %p182, %p183
      %p185 = scmp.ne.s32.totalorder %s177, %s179
      %p186 = scmp.eq.s32.totalorder %s22, 1
      %p187 = por %p185, %p186
      %p188 = scmp.ne.s32.totalorder %s179, %s180
      %p189 = scmp.eq.s32.totalorder %s22, 0
      %p190 = por %p188, %p189
      %p191 = scmp.ne.s32.totalorder %s179, %s180
      %p192 = scmp.eq.s32.totalorder %s23, 1
      %p193 = por %p191, %p192
      %p195 = scmp.ne.s32.totalorder %s180, %s194
      %p196 = scmp.eq.s32.totalorder %s23, 0
      %p197 = por %p195, %p196
      %s198 = ssub.s32 %s17, %s24
      %p199 = scmp.eq.s32.totalorder %s198, 0
      %s201 = sadd.s32 %s200, 1
      %s202 = scalar_select %p199, %s200, %s201
      %p205 = pneg %p199
      %p206 = scmp.eq.s32.totalorder %s17, 1
      %p207 = por %p205, %p206
      %p208 = scmp.ne.s32.totalorder %s200, %s203
      %p209 = scmp.eq.s32.totalorder %s17, 0
      %p210 = por %p208, %p209
      %p211 = scmp.ne.s32.totalorder %s200, %s203
      %p212 = scmp.eq.s32.totalorder %s22, 1
      %p213 = por %p211, %p212
      %p214 = scmp.ne.s32.totalorder %s203, %s204
      %p215 = scmp.eq.s32.totalorder %s22, 0
      %p216 = por %p214, %p215
      %p217 = scmp.ne.s32.totalorder %s203, %s204
      %p218 = scmp.eq.s32.totalorder %s23, 1
      %p219 = por %p217, %p218
      %p221 = scmp.ne.s32.totalorder %s204, %s220
      %p222 = scmp.eq.s32.totalorder %s23, 0
      %p223 = por %p221, %p222
      %p224 = scmp.le.s32.totalorder 1, %s17
      %p225 = scmp.lt.s32.totalorder %s17, 3
      %p226 = pnand %p224, %p225
      %p227 = pneg %p226
      // Predicated region
      $region9: #{tpu_custom_call.1} parent=5 // pred_check
        _
      $region10: #{tpu_custom_call.1} parent=5 // pred_check_branch
        %229 = sbr.rel (%p226) target = $region12
      $region11: #{tpu_custom_call.1} parent=5 // pred_region
        %s230 = ssub.s32 %s17, 1
        // Predicated region
        $region13: #{tpu_custom_call.1} parent=11 // pred_check
          %p231 = pneg %p64
        $region14: #{tpu_custom_call.1} parent=11 // pred_check_branch
          %233 = sbr.rel (%p231) target = $region16
        $region15: #{tpu_custom_call.1} parent=11 // pred_region
          _
        $region16: #{tpu_custom_call.1} parent=11 // pred_fallthru
          _
        // Predicated region
        $region17: #{tpu_custom_call.1} parent=11 // pred_check
          %p234 = pneg %p85
        $region18: #{tpu_custom_call.1} parent=11 // pred_check_branch
          %236 = sbr.rel (%p234) target = $region20
        $region19: #{tpu_custom_call.1} parent=11 // pred_region
          _
        $region20: #{tpu_custom_call.1} parent=11 // pred_fallthru
          _
        // Predicated region
        $region21: #{tpu_custom_call.1} parent=11 // pred_check
          %p237 = pneg %p106
        $region22: #{tpu_custom_call.1} parent=11 // pred_check_branch
          %239 = sbr.rel (%p237) target = $region24
        $region23: #{tpu_custom_call.1} parent=11 // pred_region
          _
        $region24: #{tpu_custom_call.1} parent=11 // pred_fallthru
          _
        // Predicated region
        $region25: #{tpu_custom_call.1} parent=11 // pred_check
          %p240 = pneg %p127
        $region26: #{tpu_custom_call.1} parent=11 // pred_check_branch
          %242 = sbr.rel (%p240) target = $region28
        $region27: #{tpu_custom_call.1} parent=11 // pred_region
          _
        $region28: #{tpu_custom_call.1} parent=11 // pred_fallthru
          _
        // Predicated region
        $region29: #{tpu_custom_call.1} parent=11 // pred_check
          %p243 = pneg %p148
        $region30: #{tpu_custom_call.1} parent=11 // pred_check_branch
          %245 = sbr.rel (%p243) target = $region32
        $region31: #{tpu_custom_call.1} parent=11 // pred_region
          _
        $region32: #{tpu_custom_call.1} parent=11 // pred_fallthru
          _
        // Predicated region
        $region33: #{tpu_custom_call.1} parent=11 // pred_check
          %p246 = pneg %p169
        $region34: #{tpu_custom_call.1} parent=11 // pred_check_branch
          %248 = sbr.rel (%p246) target = $region36
        $region35: #{tpu_custom_call.1} parent=11 // pred_region
          _
        $region36: #{tpu_custom_call.1} parent=11 // pred_fallthru
          _
        // Predicated region
        $region37: #{tpu_custom_call.1} parent=11 // pred_check
          %p249 = pneg %p190
        $region38: #{tpu_custom_call.1} parent=11 // pred_check_branch
          %251 = sbr.rel (%p249) target = $region40
        $region39: #{tpu_custom_call.1} parent=11 // pred_region
          _
        $region40: #{tpu_custom_call.1} parent=11 // pred_fallthru
          _
      $region12: #{tpu_custom_call.1} parent=5 // pred_fallthru
        _
      %p252 = scmp.lt.s32.totalorder %s17, 2
      // Predicated region
      $region41: #{tpu_custom_call.1} parent=5 // pred_check
        %p253 = pneg %p252
      $region42: #{tpu_custom_call.1} parent=5 // pred_check_branch
        %255 = sbr.rel (%p253) target = $region44
      $region43: #{tpu_custom_call.1} parent=5 // pred_region
        // Predicated region
        $region45: #{tpu_custom_call.1} parent=43 // pred_check
          %p256 = pneg %p37
        $region46: #{tpu_custom_call.1} parent=43 // pred_check_branch
          %258 = sbr.rel (%p256) target = $region48
        $region47: #{tpu_custom_call.1} parent=43 // pred_region
          %s259 = sand.u32 %s27, 1
          %s260 = scalar_lea.sflag [#allocation5], %s259
          %s261 = sand.u32 %s27, 1
          %s262 = smul.addr %s261, 64
          %s263 = scalar_lea.vmem [#allocation4], %s262
          %265 = vsyncadd %s260, 0
          %s266 = smul.addr %s17, 8
          %s267 = scalar_lea.hbm %s0, %s266
          %s268 = sshll.u32 %s267, 4
          %s269 = int_to_ptr.hbm [resolvable:$true] %s268
          %s270 = sshll.u32 %s263, 4
          %s271 = int_to_ptr.vmem [resolvable:$true] %s270
          %276 = dma.hbm_to_vmem [thread:$0]  %s269, 1024, %s271, %s260, 256, 128, 8
        $region48: #{tpu_custom_call.1} parent=43 // pred_fallthru
          _
      $region44: #{tpu_custom_call.1} parent=5 // pred_fallthru
        _
      %p277 = scmp.le.s32.totalorder 1, %s17
      %p278 = scmp.lt.s32.totalorder %s17, 3
      %p279 = pnand %p277, %p278
      %p280 = pneg %p279
      // Predicated region
      $region49: #{tpu_custom_call.1} parent=5 // pred_check
        _
      $region50: #{tpu_custom_call.1} parent=5 // pred_check_branch
        %282 = sbr.rel (%p279) target = $region52
      $region51: #{tpu_custom_call.1} parent=5 // pred_region
        %s283 = ssub.s32 %s17, 1
        %s284 = sand.u32 %s30, 1
        %s285 = scalar_lea.sflag [#allocation5], %s284
        %s286 = sand.u32 %s30, 1
        %s287 = smul.addr %s286, 64
        %s288 = scalar_lea.vmem [#allocation4], %s287
        // Predicated region
        $region53: #{tpu_custom_call.1} parent=51 // pred_check
          %p289 = pneg %p43
        $region54: #{tpu_custom_call.1} parent=51 // pred_check_branch
          %291 = sbr.rel (%p289) target = $region56
        $region55: #{tpu_custom_call.1} parent=51 // pred_region
          %293 = dma.done %s285, 1024
        $region56: #{tpu_custom_call.1} parent=51 // pred_fallthru
          _
        %s294 = sand.u32 %s30, 1
        %s295 = scalar_lea.sflag [#allocation5], %s294
        %s296 = sand.u32 %s30, 1
        %s297 = smul.addr %s296, 64
        %s298 = scalar_lea.vmem [#allocation4], %s297
        %p299 = pneg %p43
        %p300 = pneg %p40
        %p301 = pneg %p64
        %p302 = pneg %p61
        %p303 = pneg %p85
        %p304 = pneg %p82
        %p305 = pneg %p106
        %p306 = pneg %p103
        %p307 = pneg %p127
        %p308 = pneg %p124
        %p309 = pneg %p148
        %p310 = pneg %p145
        %p311 = pneg %p169
        %p312 = pneg %p166
        %p313 = pneg %p190
        %p314 = pneg %p187
        %p315 = pneg %p216
        %p316 = pneg %p213
        %s317 = sand.u32 %s203, 1
        %s318 = sand.u32 %s203, 1
        %s319 = smul.addr %s318, 64
        %s320 = scalar_lea.vmem [#allocation6], %s319
        %v321 = vld [vmem:[%s288] sm:$0xff]
        %v322 = vld [vmem:[%s288 + $0x8] sm:$0xff]
        %v323 = vld [vmem:[%s288 + $0x10] sm:$0xff]
        %v324 = vld [vmem:[%s288 + $0x18] sm:$0xff]
        %v325 = vld [vmem:[%s288 + $0x20] sm:$0xff]
        %v326 = vld [vmem:[%s288 + $0x28] sm:$0xff]
        %v327 = vld [vmem:[%s288 + $0x30] sm:$0xff]
        %v328 = vld [vmem:[%s288 + $0x38] sm:$0xff]
        %v329 = vld [vmem:[%s1] sm:$0xff]
        %v330 = vld [vmem:[%s1 + $0x8] sm:$0xff]
        %v331 = vld [vmem:[%s3] sm:$0x1]
        %v333 = vperm.slane %v331, 0
        %vm335 = vcmask 130048
        %v337 = vsel %vm335, %v321, 0
        %v340 = vsel %vm335, %v322, 0
        %v343 = vsel %vm335, %v323, 0
        %v346 = vsel %vm335, %v324, 0
        %v349 = vsel %vm335, %v325, 0
        %v352 = vsel %vm335, %v326, 0
        %v355 = vsel %vm335, %v327, 0
        %v358 = vsel %vm335, %v328, 0
        %360 = vmatpush.msra.mxu0 0.0
        %361 = vmatpush.msra.mxu0 0.0
        %362 = vmatpush.msra.mxu0 0.0
        %363 = vmatpush.msra.mxu0 0.0
        %364 = vmatpush.msra.mxu0 0.0
        %365 = vmatpush.msra.mxu0 0.0
        %366 = vmatpush.msra.mxu0 0.0
        %367 = vmatpush.msra.mxu0 0.0
        %368 = vmatpush.msra.mxu0 0.0
        %369 = vmatpush.msra.mxu0 0.0
        %370 = vmatpush.msra.mxu0 0.0
        %371 = vmatpush.msra.mxu0 0.0
        %372 = vmatpush.msra.mxu0 0.0
        %373 = vmatpush.msra.mxu0 0.0
        %374 = vmatpush.msra.mxu0 %v330
        %375 = vmatpush.msra.mxu0 %v329
        %376 = vmatmul.f32.gmra.mxu0 %v337
        %v377 = vpop.f32.mrf.mxu0
        %v378 = vadd.f32 %v333, %v377
        %379 = vmatmul.f32.gmra.mxu0 %v340
        %v380 = vpop.f32.mrf.mxu0
        %v381 = vadd.f32 %v333, %v380
        %382 = vmatmul.f32.gmra.mxu0 %v343
        %v383 = vpop.f32.mrf.mxu0
        %v384 = vadd.f32 %v333, %v383
        %385 = vmatmul.f32.gmra.mxu0 %v346
        %v386 = vpop.f32.mrf.mxu0
        %v387 = vadd.f32 %v333, %v386
        %388 = vmatmul.f32.gmra.mxu0 %v349
        %v389 = vpop.f32.mrf.mxu0
        %v390 = vadd.f32 %v333, %v389
        %391 = vmatmul.f32.gmra.mxu0 %v352
        %v392 = vpop.f32.mrf.mxu0
        %v393 = vadd.f32 %v333, %v392
        %394 = vmatmul.f32.gmra.mxu0 %v355
        %v395 = vpop.f32.mrf.mxu0
        %v396 = vadd.f32 %v333, %v395
        %397 = vmatmul.f32.gmra.mxu0 %v358
        %v398 = vpop.f32.mrf.mxu0
        %v399 = vadd.f32 %v333, %v398
        %400 = vdwg.mxu0
        %vm401 = vcmask 261120
        %402 = vst.msk [vmem:[#allocation2] sm:$0xff] %vm401, %v378
        %403 = vst.msk [vmem:[#allocation2 + $0x8] sm:$0xff] %vm401, %v381
        %404 = vst.msk [vmem:[#allocation2 + $0x10] sm:$0xff] %vm401, %v384
        %405 = vst.msk [vmem:[#allocation2 + $0x18] sm:$0xff] %vm401, %v387
        %406 = vst.msk [vmem:[#allocation2 + $0x20] sm:$0xff] %vm401, %v390
        %407 = vst.msk [vmem:[#allocation2 + $0x28] sm:$0xff] %vm401, %v393
        %408 = vst.msk [vmem:[#allocation2 + $0x30] sm:$0xff] %vm401, %v396
        %409 = vst.msk [vmem:[#allocation2 + $0x38] sm:$0xff] %vm401, %v399
        %v410 = vld [vmem:[#allocation2] sm:$0xff]
        %v411 = vld [vmem:[%s2] sm:$0xff]
        %v412 = vld [vmem:[%s2 + $0x8] sm:$0xff]
        %v413 = vld [vmem:[%s2 + $0x10] sm:$0xff]
        %v414 = vld [vmem:[%s2 + $0x18] sm:$0xff]
        %v416 = vsel %vm401, 0.0, 0
        %418 = vmatpush.msra.mxu0 0.0
        %419 = vmatpush.msra.mxu0 0.0
        %420 = vmatpush.msra.mxu0 0.0
        %421 = vmatpush.msra.mxu0 0.0
        %422 = vmatpush.msra.mxu0 0.0
        %423 = vmatpush.msra.mxu0 0.0
        %424 = vmatpush.msra.mxu0 0.0
        %425 = vmatpush.msra.mxu0 0.0
        %426 = vmatpush.msra.mxu0 0.0
        %427 = vmatpush.msra.mxu0 0.0
        %428 = vmatpush.msra.mxu0 0.0
        %429 = vmatpush.msra.mxu0 0.0
        %430 = vmatpush.msra.mxu0 %v414
        %431 = vmatpush.msra.mxu0 %v413
        %432 = vmatpush.msra.mxu0 %v412
        %433 = vmatpush.msra.mxu0 %v411
        %434 = vmatmul.f32.gmra.mxu0 %v416
        %v435 = vpop.f32.mrf.mxu0
        %v436 = vadd.f32 0.0, %v435
        %437 = vdwg.mxu0
        %v438 = vadd.f32 %v410, %v436
        %v439 = vtanh.pop %v438
        %v440 = vsel %vm401, %v439, 0.0
        %v441 = vld [vmem:[%s4] sm:$0xff]
        %v442 = vld [vmem:[%s4 + $0x8] sm:$0xff]
        %v443 = vld [vmem:[%s4 + $0x10] sm:$0xff]
        %v444 = vld [vmem:[%s4 + $0x18] sm:$0xff]
        %v445 = vld [vmem:[%s4 + $0x20] sm:$0xff]
        %v446 = vld [vmem:[%s4 + $0x28] sm:$0xff]
        %v447 = vld [vmem:[%s4 + $0x30] sm:$0xff]
        %v448 = vld [vmem:[%s4 + $0x38] sm:$0xff]
        %v449 = vld [vmem:[%s5] sm:$0x1]
        %v451 = vperm.slane %v449, 0
        %vm453 = vcmask 523264
        %v455 = vsel %vm453, %v440, 0
        %457 = vmatpush.msra.mxu0 0.0
        %458 = vmatpush.msra.mxu0 0.0
        %459 = vmatpush.msra.mxu0 0.0
        %460 = vmatpush.msra.mxu0 0.0
        %461 = vmatpush.msra.mxu0 0.0
        %462 = vmatpush.msra.mxu0 0.0
        %463 = vmatpush.msra.mxu0 0.0
        %464 = vmatpush.msra.mxu0 0.0
        %465 = vmatpush.msra.mxu0 %v448
        %466 = vmatpush.msra.mxu0 %v447
        %467 = vmatpush.msra.mxu0 %v446
        %468 = vmatpush.msra.mxu0 %v445
        %469 = vmatpush.msra.mxu0 %v444
        %470 = vmatpush.msra.mxu0 %v443
        %471 = vmatpush.msra.mxu0 %v442
        %472 = vmatpush.msra.mxu0 %v441
        %473 = vmatmul.f32.gmra.mxu0 %v455
        %v474 = vpop.f32.mrf.mxu0
        %v475 = vadd.f32 %v451, %v474
        %476 = vdwg.mxu0
        %v477 = vtanh.pop %v475
        %478 = vst.msk [vmem:[#allocation3] sm:$0xff] %vm401, %v477
        %s479 = scalar_lea.vmem [#allocation2], 8
        %v480 = vld [vmem:[%s479] sm:$0xff]
        %v481 = vld [vmem:[%s2] sm:$0xff]
        %v482 = vld [vmem:[%s2 + $0x8] sm:$0xff]
        %v483 = vld [vmem:[%s2 + $0x10] sm:$0xff]
        %v484 = vld [vmem:[%s2 + $0x18] sm:$0xff]
        %v486 = vsel %vm401, %v439, 0
        %488 = vmatpush.msra.mxu0 0.0
        %489 = vmatpush.msra.mxu0 0.0
        %490 = vmatpush.msra.mxu0 0.0
        %491 = vmatpush.msra.mxu0 0.0
        %492 = vmatpush.msra.mxu0 0.0
        %493 = vmatpush.msra.mxu0 0.0
        %494 = vmatpush.msra.mxu0 0.0
        %495 = vmatpush.msra.mxu0 0.0
        %496 = vmatpush.msra.mxu0 0.0
        %497 = vmatpush.msra.mxu0 0.0
        %498 = vmatpush.msra.mxu0 0.0
        %499 = vmatpush.msra.mxu0 0.0
        %500 = vmatpush.msra.mxu0 %v484
        %501 = vmatpush.msra.mxu0 %v483
        %502 = vmatpush.msra.mxu0 %v482
        %503 = vmatpush.msra.mxu0 %v481
        %504 = vmatmul.f32.gmra.mxu0 %v486
        %v505 = vpop.f32.mrf.mxu0
        %v506 = vadd.f32 0.0, %v505
        %507 = vdwg.mxu0
        %v508 = vadd.f32 %v480, %v506
        %v509 = vtanh.pop %v508
        %511 = vrot.lane.b32.xlu0 %v477, 32
        %v512 = vpop.permute.xlu0 %511
        %v514 = vsel %vm401, %v509, %v512
        %v515 = vld [vmem:[%s4] sm:$0xff]
        %v516 = vld [vmem:[%s4 + $0x8] sm:$0xff]
        %v517 = vld [vmem:[%s4 + $0x10] sm:$0xff]
        %v518 = vld [vmem:[%s4 + $0x18] sm:$0xff]
        %v519 = vld [vmem:[%s4 + $0x20] sm:$0xff]
        %v520 = vld [vmem:[%s4 + $0x28] sm:$0xff]
        %v521 = vld [vmem:[%s4 + $0x30] sm:$0xff]
        %v522 = vld [vmem:[%s4 + $0x38] sm:$0xff]
        %v523 = vld [vmem:[%s5] sm:$0x1]
        %v525 = vperm.slane %v523, 0
        %v528 = vsel %vm453, %v514, 0
        %530 = vmatpush.msra.mxu0 0.0
        %531 = vmatpush.msra.mxu0 0.0
        %532 = vmatpush.msra.mxu0 0.0
        %533 = vmatpush.msra.mxu0 0.0
        %534 = vmatpush.msra.mxu0 0.0
        %535 = vmatpush.msra.mxu0 0.0
        %536 = vmatpush.msra.mxu0 0.0
        %537 = vmatpush.msra.mxu0 0.0
        %538 = vmatpush.msra.mxu0 %v522
        %539 = vmatpush.msra.mxu0 %v521
        %540 = vmatpush.msra.mxu0 %v520
        %541 = vmatpush.msra.mxu0 %v519
        %542 = vmatpush.msra.mxu0 %v518
        %543 = vmatpush.msra.mxu0 %v517
        %544 = vmatpush.msra.mxu0 %v516
        %545 = vmatpush.msra.mxu0 %v515
        %546 = vmatmul.f32.gmra.mxu0 %v528
        %v547 = vpop.f32.mrf.mxu0
        %v548 = vadd.f32 %v525, %v547
        %549 = vdwg.mxu0
        %v550 = vtanh.pop %v548
        %s551 = scalar_lea.vmem [#allocation3], 8
        %552 = vst.msk [vmem:[%s551] sm:$0xff] %vm401, %v550
        %s553 = scalar_lea.vmem [#allocation2], 16
        %v554 = vld [vmem:[%s553] sm:$0xff]
        %v555 = vld [vmem:[%s2] sm:$0xff]
        %v556 = vld [vmem:[%s2 + $0x8] sm:$0xff]
        %v557 = vld [vmem:[%s2 + $0x10] sm:$0xff]
        %v558 = vld [vmem:[%s2 + $0x18] sm:$0xff]
        %v560 = vsel %vm401, %v509, 0
        %562 = vmatpush.msra.mxu0 0.0
        %563 = vmatpush.msra.mxu0 0.0
        %564 = vmatpush.msra.mxu0 0.0
        %565 = vmatpush.msra.mxu0 0.0
        %566 = vmatpush.msra.mxu0 0.0
        %567 = vmatpush.msra.mxu0 0.0
        %568 = vmatpush.msra.mxu0 0.0
        %569 = vmatpush.msra.mxu0 0.0
        %570 = vmatpush.msra.mxu0 0.0
        %571 = vmatpush.msra.mxu0 0.0
        %572 = vmatpush.msra.mxu0 0.0
        %573 = vmatpush.msra.mxu0 0.0
        %574 = vmatpush.msra.mxu0 %v558
        %575 = vmatpush.msra.mxu0 %v557
        %576 = vmatpush.msra.mxu0 %v556
        %577 = vmatpush.msra.mxu0 %v555
        %578 = vmatmul.f32.gmra.mxu0 %v560
        %v579 = vpop.f32.mrf.mxu0
        %v580 = vadd.f32 0.0, %v579
        %581 = vdwg.mxu0
        %v582 = vadd.f32 %v554, %v580
        %v583 = vtanh.pop %v582
        %585 = vrot.lane.b32.xlu0 %v550, 32
        %v586 = vpop.permute.xlu0 %585
        %v588 = vsel %vm401, %v583, %v586
        %v589 = vld [vmem:[%s4] sm:$0xff]
        %v590 = vld [vmem:[%s4 + $0x8] sm:$0xff]
        %v591 = vld [vmem:[%s4 + $0x10] sm:$0xff]
        %v592 = vld [vmem:[%s4 + $0x18] sm:$0xff]
        %v593 = vld [vmem:[%s4 + $0x20] sm:$0xff]
        %v594 = vld [vmem:[%s4 + $0x28] sm:$0xff]
        %v595 = vld [vmem:[%s4 + $0x30] sm:$0xff]
        %v596 = vld [vmem:[%s4 + $0x38] sm:$0xff]
        %v597 = vld [vmem:[%s5] sm:$0x1]
        %v599 = vperm.slane %v597, 0
        %v602 = vsel %vm453, %v588, 0
        %604 = vmatpush.msra.mxu0 0.0
        %605 = vmatpush.msra.mxu0 0.0
        %606 = vmatpush.msra.mxu0 0.0
        %607 = vmatpush.msra.mxu0 0.0
        %608 = vmatpush.msra.mxu0 0.0
        %609 = vmatpush.msra.mxu0 0.0
        %610 = vmatpush.msra.mxu0 0.0
        %611 = vmatpush.msra.mxu0 0.0
        %612 = vmatpush.msra.mxu0 %v596
        %613 = vmatpush.msra.mxu0 %v595
        %614 = vmatpush.msra.mxu0 %v594
        %615 = vmatpush.msra.mxu0 %v593
        %616 = vmatpush.msra.mxu0 %v592
        %617 = vmatpush.msra.mxu0 %v591
        %618 = vmatpush.msra.mxu0 %v590
        %619 = vmatpush.msra.mxu0 %v589
        %620 = vmatmul.f32.gmra.mxu0 %v602
        %v621 = vpop.f32.mrf.mxu0
        %v622 = vadd.f32 %v599, %v621
        %623 = vdwg.mxu0
        %v624 = vtanh.pop %v622
        %s625 = scalar_lea.vmem [#allocation3], 16
        %626 = vst.msk [vmem:[%s625] sm:$0xff] %vm401, %v624
        %s627 = scalar_lea.vmem [#allocation2], 24
        %v628 = vld [vmem:[%s627] sm:$0xff]
        %v629 = vld [vmem:[%s2] sm:$0xff]
        %v630 = vld [vmem:[%s2 + $0x8] sm:$0xff]
        %v631 = vld [vmem:[%s2 + $0x10] sm:$0xff]
        %v632 = vld [vmem:[%s2 + $0x18] sm:$0xff]
        %v634 = vsel %vm401, %v583, 0
        %636 = vmatpush.msra.mxu0 0.0
        %637 = vmatpush.msra.mxu0 0.0
        %638 = vmatpush.msra.mxu0 0.0
        %639 = vmatpush.msra.mxu0 0.0
        %640 = vmatpush.msra.mxu0 0.0
        %641 = vmatpush.msra.mxu0 0.0
        %642 = vmatpush.msra.mxu0 0.0
        %643 = vmatpush.msra.mxu0 0.0
        %644 = vmatpush.msra.mxu0 0.0
        %645 = vmatpush.msra.mxu0 0.0
        %646 = vmatpush.msra.mxu0 0.0
        %647 = vmatpush.msra.mxu0 0.0
        %648 = vmatpush.msra.mxu0 %v632
        %649 = vmatpush.msra.mxu0 %v631
        %650 = vmatpush.msra.mxu0 %v630
        %651 = vmatpush.msra.mxu0 %v629
        %652 = vmatmul.f32.gmra.mxu0 %v634
        %v653 = vpop.f32.mrf.mxu0
        %v654 = vadd.f32 0.0, %v653
        %655 = vdwg.mxu0
        %v656 = vadd.f32 %v628, %v654
        %v657 = vtanh.pop %v656
        %659 = vrot.lane.b32.xlu0 %v624, 32
        %v660 = vpop.permute.xlu0 %659
        %v662 = vsel %vm401, %v657, %v660
        %v663 = vld [vmem:[%s4] sm:$0xff]
        %v664 = vld [vmem:[%s4 + $0x8] sm:$0xff]
        %v665 = vld [vmem:[%s4 + $0x10] sm:$0xff]
        %v666 = vld [vmem:[%s4 + $0x18] sm:$0xff]
        %v667 = vld [vmem:[%s4 + $0x20] sm:$0xff]
        %v668 = vld [vmem:[%s4 + $0x28] sm:$0xff]
        %v669 = vld [vmem:[%s4 + $0x30] sm:$0xff]
        %v670 = vld [vmem:[%s4 + $0x38] sm:$0xff]
        %v671 = vld [vmem:[%s5] sm:$0x1]
        %v673 = vperm.slane %v671, 0
        %v676 = vsel %vm453, %v662, 0
        %678 = vmatpush.msra.mxu0 0.0
        %679 = vmatpush.msra.mxu0 0.0
        %680 = vmatpush.msra.mxu0 0.0
        %681 = vmatpush.msra.mxu0 0.0
        %682 = vmatpush.msra.mxu0 0.0
        %683 = vmatpush.msra.mxu0 0.0
        %684 = vmatpush.msra.mxu0 0.0
        %685 = vmatpush.msra.mxu0 0.0
        %686 = vmatpush.msra.mxu0 %v670
        %687 = vmatpush.msra.mxu0 %v669
        %688 = vmatpush.msra.mxu0 %v668
        %689 = vmatpush.msra.mxu0 %v667
        %690 = vmatpush.msra.mxu0 %v666
        %691 = vmatpush.msra.mxu0 %v665
        %692 = vmatpush.msra.mxu0 %v664
        %693 = vmatpush.msra.mxu0 %v663
        %694 = vmatmul.f32.gmra.mxu0 %v676
        %v695 = vpop.f32.mrf.mxu0
        %v696 = vadd.f32 %v673, %v695
        %697 = vdwg.mxu0
        %v698 = vtanh.pop %v696
        %s699 = scalar_lea.vmem [#allocation3], 24
        %700 = vst.msk [vmem:[%s699] sm:$0xff] %vm401, %v698
        %s701 = scalar_lea.vmem [#allocation2], 32
        %v702 = vld [vmem:[%s701] sm:$0xff]
        %v703 = vld [vmem:[%s2] sm:$0xff]
        %v704 = vld [vmem:[%s2 + $0x8] sm:$0xff]
        %v705 = vld [vmem:[%s2 + $0x10] sm:$0xff]
        %v706 = vld [vmem:[%s2 + $0x18] sm:$0xff]
        %v708 = vsel %vm401, %v657, 0
        %710 = vmatpush.msra.mxu0 0.0
        %711 = vmatpush.msra.mxu0 0.0
        %712 = vmatpush.msra.mxu0 0.0
        %713 = vmatpush.msra.mxu0 0.0
        %714 = vmatpush.msra.mxu0 0.0
        %715 = vmatpush.msra.mxu0 0.0
        %716 = vmatpush.msra.mxu0 0.0
        %717 = vmatpush.msra.mxu0 0.0
        %718 = vmatpush.msra.mxu0 0.0
        %719 = vmatpush.msra.mxu0 0.0
        %720 = vmatpush.msra.mxu0 0.0
        %721 = vmatpush.msra.mxu0 0.0
        %722 = vmatpush.msra.mxu0 %v706
        %723 = vmatpush.msra.mxu0 %v705
        %724 = vmatpush.msra.mxu0 %v704
        %725 = vmatpush.msra.mxu0 %v703
        %726 = vmatmul.f32.gmra.mxu0 %v708
        %v727 = vpop.f32.mrf.mxu0
        %v728 = vadd.f32 0.0, %v727
        %729 = vdwg.mxu0
        %v730 = vadd.f32 %v702, %v728
        %v731 = vtanh.pop %v730
        %733 = vrot.lane.b32.xlu0 %v698, 32
        %v734 = vpop.permute.xlu0 %733
        %v736 = vsel %vm401, %v731, %v734
        %v737 = vld [vmem:[%s4] sm:$0xff]
        %v738 = vld [vmem:[%s4 + $0x8] sm:$0xff]
        %v739 = vld [vmem:[%s4 + $0x10] sm:$0xff]
        %v740 = vld [vmem:[%s4 + $0x18] sm:$0xff]
        %v741 = vld [vmem:[%s4 + $0x20] sm:$0xff]
        %v742 = vld [vmem:[%s4 + $0x28] sm:$0xff]
        %v743 = vld [vmem:[%s4 + $0x30] sm:$0xff]
        %v744 = vld [vmem:[%s4 + $0x38] sm:$0xff]
        %v745 = vld [vmem:[%s5] sm:$0x1]
        %v747 = vperm.slane %v745, 0
        %v750 = vsel %vm453, %v736, 0
        %752 = vmatpush.msra.mxu0 0.0
        %753 = vmatpush.msra.mxu0 0.0
        %754 = vmatpush.msra.mxu0 0.0
        %755 = vmatpush.msra.mxu0 0.0
        %756 = vmatpush.msra.mxu0 0.0
        %757 = vmatpush.msra.mxu0 0.0
        %758 = vmatpush.msra.mxu0 0.0
        %759 = vmatpush.msra.mxu0 0.0
        %760 = vmatpush.msra.mxu0 %v744
        %761 = vmatpush.msra.mxu0 %v743
        %762 = vmatpush.msra.mxu0 %v742
        %763 = vmatpush.msra.mxu0 %v741
        %764 = vmatpush.msra.mxu0 %v740
        %765 = vmatpush.msra.mxu0 %v739
        %766 = vmatpush.msra.mxu0 %v738
        %767 = vmatpush.msra.mxu0 %v737
        %768 = vmatmul.f32.gmra.mxu0 %v750
        %v769 = vpop.f32.mrf.mxu0
        %v770 = vadd.f32 %v747, %v769
        %771 = vdwg.mxu0
        %v772 = vtanh.pop %v770
        %s773 = scalar_lea.vmem [#allocation3], 32
        %774 = vst.msk [vmem:[%s773] sm:$0xff] %vm401, %v772
        %s775 = scalar_lea.vmem [#allocation2], 40
        %v776 = vld [vmem:[%s775] sm:$0xff]
        %v777 = vld [vmem:[%s2] sm:$0xff]
        %v778 = vld [vmem:[%s2 + $0x8] sm:$0xff]
        %v779 = vld [vmem:[%s2 + $0x10] sm:$0xff]
        %v780 = vld [vmem:[%s2 + $0x18] sm:$0xff]
        %v782 = vsel %vm401, %v731, 0
        %784 = vmatpush.msra.mxu0 0.0
        %785 = vmatpush.msra.mxu0 0.0
        %786 = vmatpush.msra.mxu0 0.0
        %787 = vmatpush.msra.mxu0 0.0
        %788 = vmatpush.msra.mxu0 0.0
        %789 = vmatpush.msra.mxu0 0.0
        %790 = vmatpush.msra.mxu0 0.0
        %791 = vmatpush.msra.mxu0 0.0
        %792 = vmatpush.msra.mxu0 0.0
        %793 = vmatpush.msra.mxu0 0.0
        %794 = vmatpush.msra.mxu0 0.0
        %795 = vmatpush.msra.mxu0 0.0
        %796 = vmatpush.msra.mxu0 %v780
        %797 = vmatpush.msra.mxu0 %v779
        %798 = vmatpush.msra.mxu0 %v778
        %799 = vmatpush.msra.mxu0 %v777
        %800 = vmatmul.f32.gmra.mxu0 %v782
        %v801 = vpop.f32.mrf.mxu0
        %v802 = vadd.f32 0.0, %v801
        %803 = vdwg.mxu0
        %v804 = vadd.f32 %v776, %v802
        %v805 = vtanh.pop %v804
        %807 = vrot.lane.b32.xlu0 %v772, 32
        %v808 = vpop.permute.xlu0 %807
        %v810 = vsel %vm401, %v805, %v808
        %v811 = vld [vmem:[%s4] sm:$0xff]
        %v812 = vld [vmem:[%s4 + $0x8] sm:$0xff]
        %v813 = vld [vmem:[%s4 + $0x10] sm:$0xff]
        %v814 = vld [vmem:[%s4 + $0x18] sm:$0xff]
        %v815 = vld [vmem:[%s4 + $0x20] sm:$0xff]
        %v816 = vld [vmem:[%s4 + $0x28] sm:$0xff]
        %v817 = vld [vmem:[%s4 + $0x30] sm:$0xff]
        %v818 = vld [vmem:[%s4 + $0x38] sm:$0xff]
        %v819 = vld [vmem:[%s5] sm:$0x1]
        %v821 = vperm.slane %v819, 0
        %v824 = vsel %vm453, %v810, 0
        %826 = vmatpush.msra.mxu0 0.0
        %827 = vmatpush.msra.mxu0 0.0
        %828 = vmatpush.msra.mxu0 0.0
        %829 = vmatpush.msra.mxu0 0.0
        %830 = vmatpush.msra.mxu0 0.0
        %831 = vmatpush.msra.mxu0 0.0
        %832 = vmatpush.msra.mxu0 0.0
        %833 = vmatpush.msra.mxu0 0.0
        %834 = vmatpush.msra.mxu0 %v818
        %835 = vmatpush.msra.mxu0 %v817
        %836 = vmatpush.msra.mxu0 %v816
        %837 = vmatpush.msra.mxu0 %v815
        %838 = vmatpush.msra.mxu0 %v814
        %839 = vmatpush.msra.mxu0 %v813
        %840 = vmatpush.msra.mxu0 %v812
        %841 = vmatpush.msra.mxu0 %v811
        %842 = vmatmul.f32.gmra.mxu0 %v824
        %v843 = vpop.f32.mrf.mxu0
        %v844 = vadd.f32 %v821, %v843
        %845 = vdwg.mxu0
        %v846 = vtanh.pop %v844
        %s847 = scalar_lea.vmem [#allocation3], 40
        %848 = vst.msk [vmem:[%s847] sm:$0xff] %vm401, %v846
        %s849 = scalar_lea.vmem [#allocation2], 48
        %v850 = vld [vmem:[%s849] sm:$0xff]
        %v851 = vld [vmem:[%s2] sm:$0xff]
        %v852 = vld [vmem:[%s2 + $0x8] sm:$0xff]
        %v853 = vld [vmem:[%s2 + $0x10] sm:$0xff]
        %v854 = vld [vmem:[%s2 + $0x18] sm:$0xff]
        %v856 = vsel %vm401, %v805, 0
        %858 = vmatpush.msra.mxu0 0.0
        %859 = vmatpush.msra.mxu0 0.0
        %860 = vmatpush.msra.mxu0 0.0
        %861 = vmatpush.msra.mxu0 0.0
        %862 = vmatpush.msra.mxu0 0.0
        %863 = vmatpush.msra.mxu0 0.0
        %864 = vmatpush.msra.mxu0 0.0
        %865 = vmatpush.msra.mxu0 0.0
        %866 = vmatpush.msra.mxu0 0.0
        %867 = vmatpush.msra.mxu0 0.0
        %868 = vmatpush.msra.mxu0 0.0
        %869 = vmatpush.msra.mxu0 0.0
        %870 = vmatpush.msra.mxu0 %v854
        %871 = vmatpush.msra.mxu0 %v853
        %872 = vmatpush.msra.mxu0 %v852
        %873 = vmatpush.msra.mxu0 %v851
        %874 = vmatmul.f32.gmra.mxu0 %v856
        %v875 = vpop.f32.mrf.mxu0
        %v876 = vadd.f32 0.0, %v875
        %877 = vdwg.mxu0
        %v878 = vadd.f32 %v850, %v876
        %v879 = vtanh.pop %v878
        %881 = vrot.lane.b32.xlu0 %v846, 32
        %v882 = vpop.permute.xlu0 %881
        %v884 = vsel %vm401, %v879, %v882
        %v885 = vld [vmem:[%s4] sm:$0xff]
        %v886 = vld [vmem:[%s4 + $0x8] sm:$0xff]
        %v887 = vld [vmem:[%s4 + $0x10] sm:$0xff]
        %v888 = vld [vmem:[%s4 + $0x18] sm:$0xff]
        %v889 = vld [vmem:[%s4 + $0x20] sm:$0xff]
        %v890 = vld [vmem:[%s4 + $0x28] sm:$0xff]
        %v891 = vld [vmem:[%s4 + $0x30] sm:$0xff]
        %v892 = vld [vmem:[%s4 + $0x38] sm:$0xff]
        %v893 = vld [vmem:[%s5] sm:$0x1]
        %v895 = vperm.slane %v893, 0
        %v898 = vsel %vm453, %v884, 0
        %900 = vmatpush.msra.mxu0 0.0
        %901 = vmatpush.msra.mxu0 0.0
        %902 = vmatpush.msra.mxu0 0.0
        %903 = vmatpush.msra.mxu0 0.0
        %904 = vmatpush.msra.mxu0 0.0
        %905 = vmatpush.msra.mxu0 0.0
        %906 = vmatpush.msra.mxu0 0.0
        %907 = vmatpush.msra.mxu0 0.0
        %908 = vmatpush.msra.mxu0 %v892
        %909 = vmatpush.msra.mxu0 %v891
        %910 = vmatpush.msra.mxu0 %v890
        %911 = vmatpush.msra.mxu0 %v889
        %912 = vmatpush.msra.mxu0 %v888
        %913 = vmatpush.msra.mxu0 %v887
        %914 = vmatpush.msra.mxu0 %v886
        %915 = vmatpush.msra.mxu0 %v885
        %916 = vmatmul.f32.gmra.mxu0 %v898
        %v917 = vpop.f32.mrf.mxu0
        %v918 = vadd.f32 %v895, %v917
        %919 = vdwg.mxu0
        %v920 = vtanh.pop %v918
        %s921 = scalar_lea.vmem [#allocation3], 48
        %922 = vst.msk [vmem:[%s921] sm:$0xff] %vm401, %v920
        %s923 = scalar_lea.vmem [#allocation2], 56
        %v924 = vld [vmem:[%s923] sm:$0xff]
        %v925 = vld [vmem:[%s2] sm:$0xff]
        %v926 = vld [vmem:[%s2 + $0x8] sm:$0xff]
        %v927 = vld [vmem:[%s2 + $0x10] sm:$0xff]
        %v928 = vld [vmem:[%s2 + $0x18] sm:$0xff]
        %v930 = vsel %vm401, %v879, 0
        %932 = vmatpush.msra.mxu0 0.0
        %933 = vmatpush.msra.mxu0 0.0
        %934 = vmatpush.msra.mxu0 0.0
        %935 = vmatpush.msra.mxu0 0.0
        %936 = vmatpush.msra.mxu0 0.0
        %937 = vmatpush.msra.mxu0 0.0
        %938 = vmatpush.msra.mxu0 0.0
        %939 = vmatpush.msra.mxu0 0.0
        %940 = vmatpush.msra.mxu0 0.0
        %941 = vmatpush.msra.mxu0 0.0
        %942 = vmatpush.msra.mxu0 0.0
        %943 = vmatpush.msra.mxu0 0.0
        %944 = vmatpush.msra.mxu0 %v928
        %945 = vmatpush.msra.mxu0 %v927
        %946 = vmatpush.msra.mxu0 %v926
        %947 = vmatpush.msra.mxu0 %v925
        %948 = vmatmul.f32.gmra.mxu0 %v930
        %v949 = vpop.f32.mrf.mxu0
        %v950 = vadd.f32 0.0, %v949
        %951 = vdwg.mxu0
        %v952 = vadd.f32 %v924, %v950
        %v953 = vtanh.pop %v952
        %955 = vrot.lane.b32.xlu0 %v920, 32
        %v956 = vpop.permute.xlu0 %955
        %v958 = vsel %vm401, %v953, %v956
        %v959 = vld [vmem:[%s4] sm:$0xff]
        %v960 = vld [vmem:[%s4 + $0x8] sm:$0xff]
        %v961 = vld [vmem:[%s4 + $0x10] sm:$0xff]
        %v962 = vld [vmem:[%s4 + $0x18] sm:$0xff]
        %v963 = vld [vmem:[%s4 + $0x20] sm:$0xff]
        %v964 = vld [vmem:[%s4 + $0x28] sm:$0xff]
        %v965 = vld [vmem:[%s4 + $0x30] sm:$0xff]
        %v966 = vld [vmem:[%s4 + $0x38] sm:$0xff]
        %v967 = vld [vmem:[%s5] sm:$0x1]
        %v969 = vperm.slane %v967, 0
        %v972 = vsel %vm453, %v958, 0
        %974 = vmatpush.msra.mxu0 0.0
        %975 = vmatpush.msra.mxu0 0.0
        %976 = vmatpush.msra.mxu0 0.0
        %977 = vmatpush.msra.mxu0 0.0
        %978 = vmatpush.msra.mxu0 0.0
        %979 = vmatpush.msra.mxu0 0.0
        %980 = vmatpush.msra.mxu0 0.0
        %981 = vmatpush.msra.mxu0 0.0
        %982 = vmatpush.msra.mxu0 %v966
        %983 = vmatpush.msra.mxu0 %v965
        %984 = vmatpush.msra.mxu0 %v964
        %985 = vmatpush.msra.mxu0 %v963
        %986 = vmatpush.msra.mxu0 %v962
        %987 = vmatpush.msra.mxu0 %v961
        %988 = vmatpush.msra.mxu0 %v960
        %989 = vmatpush.msra.mxu0 %v959
        %990 = vmatmul.f32.gmra.mxu0 %v972
        %v991 = vpop.f32.mrf.mxu0
        %v992 = vadd.f32 %v969, %v991
        %993 = vdwg.mxu0
        %v994 = vtanh.pop %v992
        %s995 = scalar_lea.vmem [#allocation3], 56
        %996 = vst.msk [vmem:[%s995] sm:$0xff] %vm401, %v994
        %v997 = vld [vmem:[#allocation3] sm:$0xff]
        %v998 = vld [vmem:[#allocation3 + $0x8] sm:$0xff]
        %v999 = vld [vmem:[#allocation3 + $0x10] sm:$0xff]
        %v1000 = vld [vmem:[#allocation3 + $0x18] sm:$0xff]
        %v1001 = vld [vmem:[#allocation3 + $0x20] sm:$0xff]
        %v1002 = vld [vmem:[#allocation3 + $0x28] sm:$0xff]
        %v1003 = vld [vmem:[#allocation3 + $0x30] sm:$0xff]
        %v1004 = vld [vmem:[#allocation3 + $0x38] sm:$0xff]
        %v1005 = vld [vmem:[%s6] sm:$0xff]
        %v1006 = vld [vmem:[%s6 + $0x8] sm:$0xff]
        %v1007 = vld [vmem:[%s6 + $0x10] sm:$0xff]
        %v1008 = vld [vmem:[%s6 + $0x18] sm:$0xff]
        %v1009 = vld [vmem:[%s7] sm:$0x1]
        %v1011 = vperm.slane %v1009, 0
        %v1014 = vsel %vm401, %v997, 0
        %v1017 = vsel %vm401, %v998, 0
        %v1020 = vsel %vm401, %v999, 0
        %v1023 = vsel %vm401, %v1000, 0
        %v1026 = vsel %vm401, %v1001, 0
        %v1029 = vsel %vm401, %v1002, 0
        %v1032 = vsel %vm401, %v1003, 0
        %v1035 = vsel %vm401, %v1004, 0
        %1037 = vmatpush.msra.mxu0 0.0
        %1038 = vmatpush.msra.mxu0 0.0
        %1039 = vmatpush.msra.mxu0 0.0
        %1040 = vmatpush.msra.mxu0 0.0
        %1041 = vmatpush.msra.mxu0 0.0
        %1042 = vmatpush.msra.mxu0 0.0
        %1043 = vmatpush.msra.mxu0 0.0
        %1044 = vmatpush.msra.mxu0 0.0
        %1045 = vmatpush.msra.mxu0 0.0
        %1046 = vmatpush.msra.mxu0 0.0
        %1047 = vmatpush.msra.mxu0 0.0
        %1048 = vmatpush.msra.mxu0 0.0
        %1049 = vmatpush.msra.mxu0 %v1008
        %1050 = vmatpush.msra.mxu0 %v1007
        %1051 = vmatpush.msra.mxu0 %v1006
        %1052 = vmatpush.msra.mxu0 %v1005
        %1053 = vmatmul.f32.gmra.mxu0 %v1014
        %v1054 = vpop.f32.mrf.mxu0
        %v1055 = vadd.f32 %v1011, %v1054
        %1056 = vmatmul.f32.gmra.mxu0 %v1017
        %v1057 = vpop.f32.mrf.mxu0
        %v1058 = vadd.f32 %v1011, %v1057
        %1059 = vmatmul.f32.gmra.mxu0 %v1020
        %v1060 = vpop.f32.mrf.mxu0
        %v1061 = vadd.f32 %v1011, %v1060
        %1062 = vmatmul.f32.gmra.mxu0 %v1023
        %v1063 = vpop.f32.mrf.mxu0
        %v1064 = vadd.f32 %v1011, %v1063
        %1065 = vmatmul.f32.gmra.mxu0 %v1026
        %v1066 = vpop.f32.mrf.mxu0
        %v1067 = vadd.f32 %v1011, %v1066
        %1068 = vmatmul.f32.gmra.mxu0 %v1029
        %v1069 = vpop.f32.mrf.mxu0
        %v1070 = vadd.f32 %v1011, %v1069
        %1071 = vmatmul.f32.gmra.mxu0 %v1032
        %v1072 = vpop.f32.mrf.mxu0
        %v1073 = vadd.f32 %v1011, %v1072
        %1074 = vmatmul.f32.gmra.mxu0 %v1035
        %v1075 = vpop.f32.mrf.mxu0
        %v1076 = vadd.f32 %v1011, %v1075
        %1077 = vdwg.mxu0
        %vm1078 = vcmask 64512
        %v1079 = vsel %vm1078, %v1055, -inf
        %1080 = vmax.xlane.f32.xlu0 %v1079
        %v1081 = vpop.xlane.xlu0 %1080
        %v1082 = vsel %vm1078, %v1058, -inf
        %1083 = vmax.xlane.f32.xlu0 %v1082
        %v1084 = vpop.xlane.xlu0 %1083
        %v1085 = vsel %vm1078, %v1061, -inf
        %1086 = vmax.xlane.f32.xlu0 %v1085
        %v1087 = vpop.xlane.xlu0 %1086
        %v1088 = vsel %vm1078, %v1064, -inf
        %1089 = vmax.xlane.f32.xlu0 %v1088
        %v1090 = vpop.xlane.xlu0 %1089
        %v1091 = vsel %vm1078, %v1067, -inf
        %1092 = vmax.xlane.f32.xlu0 %v1091
        %v1093 = vpop.xlane.xlu0 %1092
        %v1094 = vsel %vm1078, %v1070, -inf
        %1095 = vmax.xlane.f32.xlu0 %v1094
        %v1096 = vpop.xlane.xlu0 %1095
        %v1097 = vsel %vm1078, %v1073, -inf
        %1098 = vmax.xlane.f32.xlu0 %v1097
        %v1099 = vpop.xlane.xlu0 %1098
        %v1100 = vsel %vm1078, %v1076, -inf
        %1101 = vmax.xlane.f32.xlu0 %v1100
        %v1102 = vpop.xlane.xlu0 %1101
        %v1103 = vsub.f32 %v1055, %v1081
        %v1104 = vsub.f32 %v1058, %v1084
        %v1105 = vsub.f32 %v1061, %v1087
        %v1106 = vsub.f32 %v1064, %v1090
        %v1107 = vsub.f32 %v1067, %v1093
        %v1108 = vsub.f32 %v1070, %v1096
        %v1109 = vsub.f32 %v1073, %v1099
        %v1110 = vsub.f32 %v1076, %v1102
        %v1111 = vmul.f32 %v1103, 1.442695
        %v1112 = vpow.pop %v1111
        %v1113 = vmul.f32 %v1104, 1.442695
        %v1114 = vpow.pop %v1113
        %v1115 = vmul.f32 %v1105, 1.442695
        %v1116 = vpow.pop %v1115
        %v1117 = vmul.f32 %v1106, 1.442695
        %v1118 = vpow.pop %v1117
        %v1119 = vmul.f32 %v1107, 1.442695
        %v1120 = vpow.pop %v1119
        %v1121 = vmul.f32 %v1108, 1.442695
        %v1122 = vpow.pop %v1121
        %v1123 = vmul.f32 %v1109, 1.442695
        %v1124 = vpow.pop %v1123
        %v1125 = vmul.f32 %v1110, 1.442695
        %v1126 = vpow.pop %v1125
        %v1127 = vsel %vm1078, %v1112, 0.0
        %1128 = vadd.xlane.f32.xlu0 %v1127
        %v1129 = vpop.xlane.xlu0 %1128
        %v1130 = vsel %vm1078, %v1114, 0.0
        %1131 = vadd.xlane.f32.xlu0 %v1130
        %v1132 = vpop.xlane.xlu0 %1131
        %v1133 = vsel %vm1078, %v1116, 0.0
        %1134 = vadd.xlane.f32.xlu0 %v1133
        %v1135 = vpop.xlane.xlu0 %1134
        %v1136 = vsel %vm1078, %v1118, 0.0
        %1137 = vadd.xlane.f32.xlu0 %v1136
        %v1138 = vpop.xlane.xlu0 %1137
        %v1139 = vsel %vm1078, %v1120, 0.0
        %1140 = vadd.xlane.f32.xlu0 %v1139
        %v1141 = vpop.xlane.xlu0 %1140
        %v1142 = vsel %vm1078, %v1122, 0.0
        %1143 = vadd.xlane.f32.xlu0 %v1142
        %v1144 = vpop.xlane.xlu0 %1143
        %v1145 = vsel %vm1078, %v1124, 0.0
        %1146 = vadd.xlane.f32.xlu0 %v1145
        %v1147 = vpop.xlane.xlu0 %1146
        %v1148 = vsel %vm1078, %v1126, 0.0
        %1149 = vadd.xlane.f32.xlu0 %v1148
        %v1150 = vpop.xlane.xlu0 %1149
        %v1151 = vlog2.pop %v1129
        %v1152 = vmul.f32 %v1151, 0.6931472
        %v1153 = vlog2.pop %v1132
        %v1154 = vmul.f32 %v1153, 0.6931472
        %v1155 = vlog2.pop %v1135
        %v1156 = vmul.f32 %v1155, 0.6931472
        %v1157 = vlog2.pop %v1138
        %v1158 = vmul.f32 %v1157, 0.6931472
        %v1159 = vlog2.pop %v1141
        %v1160 = vmul.f32 %v1159, 0.6931472
        %v1161 = vlog2.pop %v1144
        %v1162 = vmul.f32 %v1161, 0.6931472
        %v1163 = vlog2.pop %v1147
        %v1164 = vmul.f32 %v1163, 0.6931472
        %v1165 = vlog2.pop %v1150
        %v1166 = vmul.f32 %v1165, 0.6931472
        %v1167 = vsub.f32 %v1103, %v1152
        %v1168 = vsub.f32 %v1104, %v1154
        %v1169 = vsub.f32 %v1105, %v1156
        %v1170 = vsub.f32 %v1106, %v1158
        %v1171 = vsub.f32 %v1107, %v1160
        %v1172 = vsub.f32 %v1108, %v1162
        %v1173 = vsub.f32 %v1109, %v1164
        %v1174 = vsub.f32 %v1110, %v1166
        %1175 = vst.msk [vmem:[%s320] sm:$0xff] %vm1078, %v1167
        %1176 = vst.msk [vmem:[%s320 + $0x8] sm:$0xff] %vm1078, %v1168
        %1177 = vst.msk [vmem:[%s320 + $0x10] sm:$0xff] %vm1078, %v1169
        %1178 = vst.msk [vmem:[%s320 + $0x18] sm:$0xff] %vm1078, %v1170
        %1179 = vst.msk [vmem:[%s320 + $0x20] sm:$0xff] %vm1078, %v1171
        %1180 = vst.msk [vmem:[%s320 + $0x28] sm:$0xff] %vm1078, %v1172
        %1181 = vst.msk [vmem:[%s320 + $0x30] sm:$0xff] %vm1078, %v1173
        %1182 = vst.msk [vmem:[%s320 + $0x38] sm:$0xff] %vm1078, %v1174
        %s1183 = sand.u32 %s203, 1
        %s1184 = sand.u32 %s203, 1
        %s1185 = smul.addr %s1184, 64
        %s1186 = scalar_lea.vmem [#allocation6], %s1185
        // Predicated region
        $region57: #{tpu_custom_call.1} parent=51 // pred_check
          %p1187 = pneg %p213
        $region58: #{tpu_custom_call.1} parent=51 // pred_check_branch
          %1189 = sbr.rel (%p1187) target = $region60
        $region59: #{tpu_custom_call.1} parent=51 // pred_region
          %s1190 = smul.addr %s22, 8
          %s1191 = scalar_lea.vmem %s8, %s1190
          // Predicated region
          $region61: #{tpu_custom_call.1} parent=59 // pred_check
            _
          $region62: #{tpu_custom_call.1} parent=59 // pred_check_branch
            %1193 = sbr.rel (0) target = $region64
          $region63: #{tpu_custom_call.1} parent=59 // pred_region
            // Predicated region
            $region65: #{tpu_custom_call.1} parent=63 // pred_check
              _
            $region66: #{tpu_custom_call.1} parent=63 // pred_check_branch
              %1195 = sbr.rel (0) target = $region68
            $region67: #{tpu_custom_call.1} parent=63 // pred_region
              // Predicated region
              $region80: #{tpu_custom_call.1} parent=67 // pred_check
                _
              $region81: #{tpu_custom_call.1} parent=67 // pred_check_branch
                %1225 = sbr.rel (0) target = $region83
              $region82: #{tpu_custom_call.1} parent=67 // pred_region
                loop: start=0, step=1, limit=1
                $region84: #{tpu_custom_call.1} parent=82 // loop_pre_header
                  _
                $region85: #{tpu_custom_call.1} parent=82 // loop_header
                  %s1227 = sphi 0, %s1231
                  %p1228 = scmp.ge.s32.totalorder %s1227, 1
                  %s1232 = sphi %s1186, %s1186
                  %s1233 = sphi %s1191, %s1191
                $region86: #{tpu_custom_call.1} parent=82 // loop_header_branch
                  %1230 = sbr.rel (%p1228) target = $region90
                $region87: #{tpu_custom_call.1} parent=82 // loop_body
                  %v1234 = vld [vmem:[%s1232] sm:$0xff]
                  %1235 = vst [vmem:[%s1233] sm:$0xff] %v1234
                  %v1236 = vld [vmem:[%s1232 + $0x8] sm:$0xff]
                  %1237 = vst [vmem:[%s1233 + $0x10] sm:$0xff] %v1236
                  %v1238 = vld [vmem:[%s1232 + $0x10] sm:$0xff]
                  %1239 = vst [vmem:[%s1233 + $0x20] sm:$0xff] %v1238
                  %v1240 = vld [vmem:[%s1232 + $0x18] sm:$0xff]
                  %1241 = vst [vmem:[%s1233 + $0x30] sm:$0xff] %v1240
                  %v1242 = vld [vmem:[%s1232 + $0x20] sm:$0xff]
                  %1243 = vst [vmem:[%s1233 + $0x40] sm:$0xff] %v1242
                  %v1244 = vld [vmem:[%s1232 + $0x28] sm:$0xff]
                  %1245 = vst [vmem:[%s1233 + $0x50] sm:$0xff] %v1244
                  %v1246 = vld [vmem:[%s1232 + $0x30] sm:$0xff]
                  %1247 = vst [vmem:[%s1233 + $0x60] sm:$0xff] %v1246
                  %v1248 = vld [vmem:[%s1232 + $0x38] sm:$0xff]
                  %1249 = vst [vmem:[%s1233 + $0x70] sm:$0xff] %v1248
                $region88: #{tpu_custom_call.1} parent=82 // loop_footer
                  %s1231 = sadd.s32 1, %s1227
                $region89: #{tpu_custom_call.1} parent=82 // loop_footer_branch
                  %1226 = sbr.rel target = $region85
                $region90: #{tpu_custom_call.1} parent=82 // loop_exit
                  _
              $region83: #{tpu_custom_call.1} parent=67 // pred_fallthru
                _
              // Predicated region
              $region91: #{tpu_custom_call.1} parent=67 // pred_check
                _
              $region92: #{tpu_custom_call.1} parent=67 // pred_check_branch
                %1251 = sbr.rel target = $region94
              $region93: #{tpu_custom_call.1} parent=67 // pred_region
                _
              $region94: #{tpu_custom_call.1} parent=67 // pred_fallthru
                _
            $region68: #{tpu_custom_call.1} parent=63 // pred_fallthru
              _
            // Predicated region
            $region69: #{tpu_custom_call.1} parent=63 // pred_check
              _
            $region70: #{tpu_custom_call.1} parent=63 // pred_check_branch
              %1197 = sbr.rel target = $region72
            $region71: #{tpu_custom_call.1} parent=63 // pred_region
              %s1199 = ssub.s32 256, 1
              loop: start=0, step=1, limit=1
              $region73: #{tpu_custom_call.1} parent=71 // loop_pre_header
                _
              $region74: #{tpu_custom_call.1} parent=71 // loop_header
                %s1201 = sphi 0, %s1205
                %p1202 = scmp.ge.s32.totalorder %s1201, 1
                %s1206 = sphi %s1186, %s1186
                %s1207 = sphi %s1191, %s1191
              $region75: #{tpu_custom_call.1} parent=71 // loop_header_branch
                %1204 = sbr.rel (%p1202) target = $region79
              $region76: #{tpu_custom_call.1} parent=71 // loop_body
                %v1208 = vld [vmem:[%s1206] sm:%s1199]
                %1209 = vst [vmem:[%s1207] sm:%s1199] %v1208
                %v1210 = vld [vmem:[%s1206 + $0x8] sm:%s1199]
                %1211 = vst [vmem:[%s1207 + $0x10] sm:%s1199] %v1210
                %v1212 = vld [vmem:[%s1206 + $0x10] sm:%s1199]
                %1213 = vst [vmem:[%s1207 + $0x20] sm:%s1199] %v1212
                %v1214 = vld [vmem:[%s1206 + $0x18] sm:%s1199]
                %1215 = vst [vmem:[%s1207 + $0x30] sm:%s1199] %v1214
                %v1216 = vld [vmem:[%s1206 + $0x20] sm:%s1199]
                %1217 = vst [vmem:[%s1207 + $0x40] sm:%s1199] %v1216
                %v1218 = vld [vmem:[%s1206 + $0x28] sm:%s1199]
                %1219 = vst [vmem:[%s1207 + $0x50] sm:%s1199] %v1218
                %v1220 = vld [vmem:[%s1206 + $0x30] sm:%s1199]
                %1221 = vst [vmem:[%s1207 + $0x60] sm:%s1199] %v1220
                %v1222 = vld [vmem:[%s1206 + $0x38] sm:%s1199]
                %1223 = vst [vmem:[%s1207 + $0x70] sm:%s1199] %v1222
              $region77: #{tpu_custom_call.1} parent=71 // loop_footer
                %s1205 = sadd.s32 1, %s1201
              $region78: #{tpu_custom_call.1} parent=71 // loop_footer_branch
                %1200 = sbr.rel target = $region74
              $region79: #{tpu_custom_call.1} parent=71 // loop_exit
                _
            $region72: #{tpu_custom_call.1} parent=63 // pred_fallthru
              _
          $region64: #{tpu_custom_call.1} parent=59 // pred_fallthru
            _
          %1252 = vnop
        $region60: #{tpu_custom_call.1} parent=51 // pred_fallthru
          _
      $region52: #{tpu_custom_call.1} parent=5 // pred_fallthru
        _
      %p1253 = scmp.le.s32.totalorder 2, %s17
      // Predicated region
      $region95: #{tpu_custom_call.1} parent=5 // pred_check
        %p1254 = pneg %p1253
      $region96: #{tpu_custom_call.1} parent=5 // pred_check_branch
        %1256 = sbr.rel (%p1254) target = $region98
      $region97: #{tpu_custom_call.1} parent=5 // pred_region
        %s1257 = ssub.s32 %s17, 2
        // Predicated region
        $region99: #{tpu_custom_call.1} parent=97 // pred_check
          %p1258 = pneg %p219
        $region100: #{tpu_custom_call.1} parent=97 // pred_check_branch
          %1260 = sbr.rel (%p1258) target = $region102
        $region101: #{tpu_custom_call.1} parent=97 // pred_region
          %s1261 = sand.u32 %s204, 1
          %s1262 = sand.u32 %s204, 1
          %s1263 = smul.addr %s1262, 64
          %s1264 = scalar_lea.vmem [#allocation6], %s1263
        $region102: #{tpu_custom_call.1} parent=97 // pred_fallthru
          _
      $region98: #{tpu_custom_call.1} parent=5 // pred_fallthru
        _
    $region6: #{tpu_custom_call.1} parent=1 // loop_footer
      %s21 = sadd.s32 1, %s17
    $region7: #{tpu_custom_call.1} parent=1 // loop_footer_branch
      %16 = sbr.rel target = $region3
    $region8: #{tpu_custom_call.1} parent=1 // loop_exit
      _
    %1265 = vsyncpa [#allocation5], 1
    %s1266 = scalar_lea.sflag [#allocation5], 1
    %1267 = vsyncpa %s1266, 1

</llo_original>
